<compile_context>
chip_gen: v7x
topology: tpu7x:2x2x1
jax: 0.10.0
libtpu: 0.0.40
codegen_flags: <defaults>
</compile_context>

<pallas_src>
import jax
import jax.numpy as jnp
from jax.experimental import pallas as pl
from jax.experimental.pallas import tpu as pltpu


def _round_up(a, b):
    return (a + b - 1) // b * b


# ---------------------------------------------------------------------------
# Fused kernel: node projections + edge MLP + one-hot gather/scatter + update
# ---------------------------------------------------------------------------
def _scene_gnn_kernel(
        # inputs
        x_ref, w_all_ref, b_node_ref,
        src_col_ref, dst_col_ref, dst_row_ref,
        ef_ref, w_edge_ref, b_msg_ref, w_agg_ref,
        # output
        out_ref,
        # scratch
        hs_s, hd_s, hx_s, acc_s, iota_g_s, iota_s_s):
    k = pl.program_id(0)
    f = acc_s.shape[1]
    n_p = acc_s.shape[0]
    te = ef_ref.shape[0]

    # ---- prologue: fused node projections + accumulator / iota init -------
    @pl.when(k == 0)
    def _prologue():
        hall = jnp.dot(x_ref[...], w_all_ref[...],
                       preferred_element_type=jnp.float32)      # (n_p, 3f)
        hs_s[...] = hall[:, :f].astype(jnp.bfloat16)
        hd_s[...] = hall[:, f:2 * f].astype(jnp.bfloat16)
        hx_s[...] = hall[:, 2 * f:] + b_node_ref[...]
        acc_s[...] = jnp.zeros_like(acc_s)
        # grid-invariant node-id iotas, hoisted out of the per-tile body
        iota_g_s[...] = jax.lax.broadcasted_iota(jnp.int32, (te, n_p), 1)
        iota_s_s[...] = jax.lax.broadcasted_iota(jnp.int32, (n_p, te), 0)

    # ---- gather endpoint rows on the MXU (no HBM DMAs, no semaphores) -----
    # padded edges carry src/dst == -1 -> all-zero one-hot rows
    oh_src = (iota_g_s[...] == src_col_ref[...]).astype(jnp.bfloat16)   # (te, n_p)
    oh_dst = (iota_g_s[...] == dst_col_ref[...]).astype(jnp.bfloat16)   # (te, n_p)
    hs_rows = jnp.dot(oh_src, hs_s[...], preferred_element_type=jnp.float32)
    hd_rows = jnp.dot(oh_dst, hd_s[...], preferred_element_type=jnp.float32)

    # ---- per-edge messages: relu(hs[src] + hd[dst] + ef @ W_edge + b) -----
    he = jnp.dot(ef_ref[...], w_edge_ref[...],
                 preferred_element_type=jnp.float32)
    msg = jnp.maximum(hs_rows + hd_rows + he + b_msg_ref[...], 0.0)

    # ---- scatter-add by destination: transposed one-hot on the MXU --------
    oh_dst_t = (iota_s_s[...] == dst_row_ref[...]).astype(jnp.bfloat16)  # (n_p, te)
    acc_s[...] += jnp.dot(oh_dst_t, msg.astype(jnp.bfloat16),
                          preferred_element_type=jnp.float32)

    # ---- epilogue: node-update MLP on the resident accumulator ------------
    @pl.when(k == pl.num_programs(0) - 1)
    def _epilogue():
        upd = jnp.dot(acc_s[...].astype(jnp.bfloat16), w_agg_ref[...],
                      preferred_element_type=jnp.float32)
        out_ref[...] = jnp.maximum(hx_s[...] + upd, 0.0)


# ---------------------------------------------------------------------------
# Parameters
# ---------------------------------------------------------------------------
def init_params(key, f_in, f_edge, num_features, num_rels):
    assert num_features % 128 == 0, "num_features must be a multiple of 128 (lane-dense)"
    ks = jax.random.split(key, 10)
    s = 0.05
    return {
        # encoder — split weights (W_msg = [W_src; W_dst; W_edge],
        #                          W_node = [W_node_x; W_node_agg])
        "w_src": (s * jax.random.normal(ks[0], (f_in, num_features))).astype(jnp.bfloat16),
        "w_dst": (s * jax.random.normal(ks[1], (f_in, num_features))).astype(jnp.bfloat16),
        "w_edge": (s * jax.random.normal(ks[2], (f_edge, num_features))).astype(jnp.bfloat16),
        "b_msg": (s * jax.random.normal(ks[3], (num_features,))).astype(jnp.float32),
        "w_node_x": (s * jax.random.normal(ks[4], (f_in, num_features))).astype(jnp.bfloat16),
        "w_node_agg": (s * jax.random.normal(ks[5], (num_features, num_features))).astype(jnp.bfloat16),
        "b_node": (s * jax.random.normal(ks[6], (num_features,))).astype(jnp.float32),
        # decoder: built in __init__ but NOT used in forward (kept for fidelity)
        # TODO(synk): Dropout/Linear/Sigmoid decoder is never invoked by forward.
        "w_dec1": (s * jax.random.normal(ks[7], (2 * num_features, 256))).astype(jnp.float32),
        "b_dec1": jnp.zeros((256,), jnp.float32),
        "w_dec2": (s * jax.random.normal(ks[8], (256, num_rels))).astype(jnp.float32),
        "b_dec2": jnp.zeros((num_rels,), jnp.float32),
    }


# ---------------------------------------------------------------------------
# Forward (== SceneConstructionModel.forward -> encoder(x, edge_index, ef))
# ---------------------------------------------------------------------------
def scene_construction_forward(params, x, edge_index, edge_features):
    n, f_in = x.shape
    e, f_e = edge_features.shape
    f = params["w_src"].shape[1]

    src = edge_index[0].astype(jnp.int32)
    dst = edge_index[1].astype(jnp.int32)

    # ---- padding: sublane-aligned nodes, tile-aligned edges ---------------
    n_p = _round_up(max(n, 8), 8)
    if e > 256:
        te = 256                                   # v6e/v7x MXU-friendly edge tile
        e_p = _round_up(e, te)
    else:
        te = _round_up(max(e, 8), 8)               # single full-extent edge tile
        e_p = te

    # bf16 inputs cast once in the wrapper (halves HBM traffic for x / ef)
    x_p = jnp.zeros((n_p, f_in), jnp.bfloat16).at[:n].set(x.astype(jnp.bfloat16))
    ef_p = jnp.zeros((e_p, f_e), jnp.bfloat16).at[:e].set(
        edge_features.astype(jnp.bfloat16))
    # padded edges get index -1 so their one-hot gather/scatter rows are zero
    src_col = jnp.full((e_p, 1), -1, jnp.int32).at[:e, 0].set(src)
    dst_col = jnp.full((e_p, 1), -1, jnp.int32).at[:e, 0].set(dst)
    dst_row = jnp.full((1, e_p), -1, jnp.int32).at[0, :e].set(dst)

    w_all = jnp.concatenate(
        [params["w_src"], params["w_dst"], params["w_node_x"]], axis=1)  # (f_in, 3f) bf16
    b_msg = params["b_msg"].reshape(1, f)
    b_node = params["b_node"].reshape(1, f)

    n_tiles = e_p // te

    # ---- VMEM budget (all resident tensors + double-buffered edge tiles) --
    vmem = (n_p * f_in * 2 + f_in * 3 * f * 2 + 2 * f * 4          # x, w_all, biases
            + 2 * (2 * te * 4 + te * 4)                            # src/dst index tiles
            + 2 * te * f_e * 2                                     # ef (double-buffered)
            + f_e * f * 2 + f * f * 2                              # w_edge, w_node_agg
            + n_p * f * 4                                          # out
            + 2 * n_p * f * 2 + 2 * n_p * f * 4                    # hs, hd, hx, acc
            + 2 * te * n_p * 4                                     # cached iotas
            + (4 << 20))                                           # Mosaic headroom
    vmem = int(min(max(vmem, 8 << 20), 36 << 20))                  # v7x-safe clamp

    flops = (2 * n_p * f_in * 3 * f                 # node projections
             + 4 * e_p * n_p * f                    # one-hot gathers
             + 2 * e_p * f_e * f                    # edge projection
             + 2 * n_p * e_p * f                    # one-hot scatter
             + 2 * n_p * f * f)                     # node update
    bytes_accessed = (n_p * f_in * 2 + f_in * 3 * f * 2 + 2 * f * 4
                      + e_p * f_e * 2 + 3 * e_p * 4
                      + f_e * f * 2 + f * f * 2 + n_p * f * 4)

    out_p = pl.pallas_call(
        _scene_gnn_kernel,
        out_shape=jax.ShapeDtypeStruct((n_p, f), jnp.float32),
        grid_spec=pltpu.PrefetchScalarGridSpec(
            num_scalar_prefetch=0,
            grid=(n_tiles,),
            in_specs=[
                pl.BlockSpec((n_p, f_in), lambda k: (0, 0)),   # x (resident)
                pl.BlockSpec((f_in, 3 * f), lambda k: (0, 0)),  # [W_src|W_dst|W_node_x]
                pl.BlockSpec((1, f), lambda k: (0, 0)),         # b_node
                pl.BlockSpec((te, 1), lambda k: (k, 0)),        # src (column)
                pl.BlockSpec((te, 1), lambda k: (k, 0)),        # dst (column)
                pl.BlockSpec((1, te), lambda k: (0, k)),        # dst (row / lane)
                pl.BlockSpec((te, f_e), lambda k: (k, 0)),      # edge features
                pl.BlockSpec((f_e, f), lambda k: (0, 0)),       # W_edge
                pl.BlockSpec((1, f), lambda k: (0, 0)),         # b_msg
                pl.BlockSpec((f, f), lambda k: (0, 0)),         # W_node_agg
            ],
            out_specs=pl.BlockSpec((n_p, f), lambda k: (0, 0)),
            scratch_shapes=[
                pltpu.VMEM((n_p, f), jnp.bfloat16),   # hs
                pltpu.VMEM((n_p, f), jnp.bfloat16),   # hd
                pltpu.VMEM((n_p, f), jnp.float32),    # hx
                pltpu.VMEM((n_p, f), jnp.float32),    # agg accumulator
                pltpu.VMEM((te, n_p), jnp.int32),     # gather node-id iota
                pltpu.VMEM((n_p, te), jnp.int32),     # scatter node-id iota
            ],
        ),
        compiler_params=pltpu.CompilerParams(
            dimension_semantics=("arbitrary",),       # reduction over edge tiles
            vmem_limit_bytes=vmem,
        ),
        cost_estimate=pl.CostEstimate(
            flops=flops, transcendentals=0, bytes_accessed=bytes_accessed),
    )(x_p, w_all, b_node, src_col, dst_col, dst_row,
      ef_p, params["w_edge"], b_msg, params["w_node_agg"])

    # NOTE: the PyTorch forward does NOT apply self.decoder; we match that.
    return out_p[:n]


# ---------------------------------------------------------------------------
# Pure-JAX reference (f32) for correctness checking
# ---------------------------------------------------------------------------
def _reference(params, x, edge_index, edge_features):
    f32 = jnp.float32
    ws, wd = params["w_src"].astype(f32), params["w_dst"].astype(f32)
    we, wx = params["w_edge"].astype(f32), params["w_node_x"].astype(f32)
    wa = params["w_node_agg"].astype(f32)
    src, dst = edge_index[0], edge_index[1]
    hs, hd = x @ ws, x @ wd
    msg = jax.nn.relu(hs[src] + hd[dst] + edge_features @ we + params["b_msg"])
    agg = jnp.zeros((x.shape[0], ws.shape[1]), f32).at[dst].add(msg)
    return jax.nn.relu(x @ wx + params["b_node"] + agg @ wa)


if __name__ == "__main__":
    N_NODES, N_EDGES = 64, 300
    F_IN, F_EDGE = 16, 8
    NUM_FEATURES = 128     # stands in for the module default 512 (kept lane-dense)
    NUM_RELS = 4

    key = jax.random.PRNGKey(0)
    k_x, k_e, k_ef, k_p = jax.random.split(key, 4)
    x = jax.random.normal(k_x, (N_NODES, F_IN), jnp.float32)
    edge_index = jax.random.randint(k_e, (2, N_EDGES), 0, N_NODES, jnp.int32)
    edge_features = jax.random.normal(k_ef, (N_EDGES, F_EDGE), jnp.float32)
    params = init_params(k_p, F_IN, F_EDGE, NUM_FEATURES, NUM_RELS)

    fwd = jax.jit(scene_construction_forward)
    out = jax.block_until_ready(fwd(params, x, edge_index, edge_features))

    ref = _reference(params, x, edge_index, edge_features)
    assert out.shape == (N_NODES, NUM_FEATURES)
    assert out.dtype == jnp.float32
    assert bool(jnp.all(jnp.isfinite(out)))
    max_err = float(jnp.max(jnp.abs(out - ref)))
    assert bool(jnp.allclose(out, ref, atol=1e-1, rtol=1e-1)), f"max err {max_err}"
    print("KERNEL_OK")
</pallas_src>

<mosaic_0001>
module attributes {stable_mosaic.version = 11 : i64} {
  func.func @_scene_gnn_kernel(%arg0: i32, %arg1: memref<64x16xbf16, #tpu.memory_space<vmem>>, %arg2: memref<16x384xbf16, #tpu.memory_space<vmem>>, %arg3: memref<1x128xf32, #tpu.memory_space<vmem>>, %arg4: memref<256x1xi32, #tpu.memory_space<vmem>>, %arg5: memref<256x1xi32, #tpu.memory_space<vmem>>, %arg6: memref<1x256xi32, #tpu.memory_space<vmem>>, %arg7: memref<256x8xbf16, #tpu.memory_space<vmem>>, %arg8: memref<8x128xbf16, #tpu.memory_space<vmem>>, %arg9: memref<1x128xf32, #tpu.memory_space<vmem>>, %arg10: memref<128x128xbf16, #tpu.memory_space<vmem>>, %arg11: memref<64x128xf32, #tpu.memory_space<vmem>>, %arg12: memref<64x128xbf16, #tpu.memory_space<vmem>>, %arg13: memref<64x128xbf16, #tpu.memory_space<vmem>>, %arg14: memref<64x128xf32, #tpu.memory_space<vmem>>, %arg15: memref<64x128xf32, #tpu.memory_space<vmem>>, %arg16: memref<256x64xi32, #tpu.memory_space<vmem>>, %arg17: memref<64x256xi32, #tpu.memory_space<vmem>>) attributes {dimension_semantics = [#tpu.dimension_semantics<arbitrary>], iteration_bounds = array<i64: 2>, scalar_prefetch = 0 : i64, scratch_operands = 6 : i64, tpu.core_type = #tpu.core_type<tc>, window_params = [{pipeline_mode = #tpu.pipeline_mode<synchronous>, transform_indices = @transform_0, window_bounds = array<i64: 64, 16>}, {pipeline_mode = #tpu.pipeline_mode<synchronous>, transform_indices = @transform_1, window_bounds = array<i64: 16, 384>}, {pipeline_mode = #tpu.pipeline_mode<synchronous>, transform_indices = @transform_2, window_bounds = array<i64: 1, 128>}, {transform_indices = @transform_3, window_bounds = array<i64: 256, 1>}, {transform_indices = @transform_4, window_bounds = array<i64: 256, 1>}, {transform_indices = @transform_5, window_bounds = array<i64: 1, 256>}, {transform_indices = @transform_6, window_bounds = array<i64: 256, 8>}, {pipeline_mode = #tpu.pipeline_mode<synchronous>, transform_indices = @transform_7, window_bounds = array<i64: 8, 128>}, {pipeline_mode = #tpu.pipeline_mode<synchronous>, transform_indices = @transform_8, window_bounds = array<i64: 1, 128>}, {pipeline_mode = #tpu.pipeline_mode<synchronous>, transform_indices = @transform_9, window_bounds = array<i64: 128, 128>}, {pipeline_mode = #tpu.pipeline_mode<synchronous>, transform_indices = @transform_10, window_bounds = array<i64: 64, 128>}]} {
    %c0_i32 = arith.constant 0 : i32
    %0 = arith.cmpi eq, %arg0, %c0_i32 : i32
    %1 = arith.extui %0 : i1 to i32
    %c0_i32_0 = arith.constant 0 : i32
    %2 = arith.cmpi ne, %1, %c0_i32_0 : i32
    scf.if %2 {
      %c0_31 = arith.constant 0 : index
      %c0_32 = arith.constant 0 : index
      %46 = vector.load %arg1[%c0_31, %c0_32] : memref<64x16xbf16, #tpu.memory_space<vmem>>, vector<64x16xbf16>
      %c0_33 = arith.constant 0 : index
      %c0_34 = arith.constant 0 : index
      %47 = vector.load %arg2[%c0_33, %c0_34] : memref<16x384xbf16, #tpu.memory_space<vmem>>, vector<16x384xbf16>
      %cst_35 = arith.constant dense<0.000000e+00> : vector<64x384xf32>
      %48 = tpu.matmul %46, %47, %cst_35 {dimension_numbers = #tpu.dot_dimension_numbers<[1], [0], [0], [1], [0, 0, 1, 1], [], []>} : vector<64x16xbf16>, vector<16x384xbf16>, vector<64x384xf32> -> vector<64x384xf32>
      %49 = vector.extract_strided_slice %48 {offsets = [0, 0], sizes = [64, 128], strides = [1, 1]} : vector<64x384xf32> to vector<64x128xf32>
      %50 = arith.truncf %49 : vector<64x128xf32> to vector<64x128xbf16>
      %c0_36 = arith.constant 0 : index
      %c0_37 = arith.constant 0 : index
      %51 = vector.load %arg12[%c0_36, %c0_37] : memref<64x128xbf16, #tpu.memory_space<vmem>>, vector<64x128xbf16>
      tpu.vector_store %arg12[%c0_36, %c0_37], %50 {strides = array<i32>} : memref<64x128xbf16, #tpu.memory_space<vmem>>, vector<64x128xbf16>,
      %52 = vector.extract_strided_slice %48 {offsets = [0, 128], sizes = [64, 128], strides = [1, 1]} : vector<64x384xf32> to vector<64x128xf32>
      %53 = arith.truncf %52 : vector<64x128xf32> to vector<64x128xbf16>
      %c0_38 = arith.constant 0 : index
      %c0_39 = arith.constant 0 : index
      %54 = vector.load %arg13[%c0_38, %c0_39] : memref<64x128xbf16, #tpu.memory_space<vmem>>, vector<64x128xbf16>
      tpu.vector_store %arg13[%c0_38, %c0_39], %53 {strides = array<i32>} : memref<64x128xbf16, #tpu.memory_space<vmem>>, vector<64x128xbf16>,
      %55 = vector.extract_strided_slice %48 {offsets = [0, 256], sizes = [64, 128], strides = [1, 1]} : vector<64x384xf32> to vector<64x128xf32>
      %c0_40 = arith.constant 0 : index
      %c0_41 = arith.constant 0 : index
      %56 = vector.load %arg3[%c0_40, %c0_41] : memref<1x128xf32, #tpu.memory_space<vmem>>, vector<1x128xf32>
      %57 = vector.broadcast %56 : vector<1x128xf32> to vector<64x128xf32>
      %58 = arith.addf %55, %57 : vector<64x128xf32>
      %c0_42 = arith.constant 0 : index
      %c0_43 = arith.constant 0 : index
      %59 = vector.load %arg14[%c0_42, %c0_43] : memref<64x128xf32, #tpu.memory_space<vmem>>, vector<64x128xf32>
      tpu.vector_store %arg14[%c0_42, %c0_43], %58 {strides = array<i32>} : memref<64x128xf32, #tpu.memory_space<vmem>>, vector<64x128xf32>,
      %cst_44 = arith.constant 0.000000e+00 : f32
      %60 = vector.broadcast %cst_44 : f32 to vector<64x128xf32>
      %c0_45 = arith.constant 0 : index
      %c0_46 = arith.constant 0 : index
      %61 = vector.load %arg15[%c0_45, %c0_46] : memref<64x128xf32, #tpu.memory_space<vmem>>, vector<64x128xf32>
      tpu.vector_store %arg15[%c0_45, %c0_46], %60 {strides = array<i32>} : memref<64x128xf32, #tpu.memory_space<vmem>>, vector<64x128xf32>,
      %62 = tpu.iota {dimensions = array<i32: 1>} : vector<256x64xi32>
      %c0_47 = arith.constant 0 : index
      %c0_48 = arith.constant 0 : index
      %63 = vector.load %arg16[%c0_47, %c0_48] : memref<256x64xi32, #tpu.memory_space<vmem>>, vector<256x64xi32>
      tpu.vector_store %arg16[%c0_47, %c0_48], %62 {strides = array<i32>} : memref<256x64xi32, #tpu.memory_space<vmem>>, vector<256x64xi32>,
      %64 = tpu.iota {dimensions = array<i32: 0>} : vector<64x256xi32>
      %c0_49 = arith.constant 0 : index
      %c0_50 = arith.constant 0 : index
      %65 = vector.load %arg17[%c0_49, %c0_50] : memref<64x256xi32, #tpu.memory_space<vmem>>, vector<64x256xi32>
      tpu.vector_store %arg17[%c0_49, %c0_50], %64 {strides = array<i32>} : memref<64x256xi32, #tpu.memory_space<vmem>>, vector<64x256xi32>,
    } else {
    }
    %c0 = arith.constant 0 : index
    %c0_1 = arith.constant 0 : index
    %3 = vector.load %arg16[%c0, %c0_1] : memref<256x64xi32, #tpu.memory_space<vmem>>, vector<256x64xi32>
    %c0_2 = arith.constant 0 : index
    %c0_3 = arith.constant 0 : index
    %4 = vector.load %arg4[%c0_2, %c0_3] : memref<256x1xi32, #tpu.memory_space<vmem>>, vector<256x1xi32>
    %5 = vector.broadcast %4 : vector<256x1xi32> to vector<256x64xi32>
    %6 = arith.cmpi eq, %3, %5 : vector<256x64xi32>
    %7 = arith.extui %6 : vector<256x64xi1> to vector<256x64xi32>
    %8 = arith.sitofp %7 : vector<256x64xi32> to vector<256x64xf32>
    %9 = arith.truncf %8 : vector<256x64xf32> to vector<256x64xbf16>
    %c0_4 = arith.constant 0 : index
    %c0_5 = arith.constant 0 : index
    %10 = vector.load %arg16[%c0_4, %c0_5] : memref<256x64xi32, #tpu.memory_space<vmem>>, vector<256x64xi32>
    %c0_6 = arith.constant 0 : index
    %c0_7 = arith.constant 0 : index
    %11 = vector.load %arg5[%c0_6, %c0_7] : memref<256x1xi32, #tpu.memory_space<vmem>>, vector<256x1xi32>
    %12 = vector.broadcast %11 : vector<256x1xi32> to vector<256x64xi32>
    %13 = arith.cmpi eq, %10, %12 : vector<256x64xi32>
    %14 = arith.extui %13 : vector<256x64xi1> to vector<256x64xi32>
    %15 = arith.sitofp %14 : vector<256x64xi32> to vector<256x64xf32>
    %16 = arith.truncf %15 : vector<256x64xf32> to vector<256x64xbf16>
    %c0_8 = arith.constant 0 : index
    %c0_9 = arith.constant 0 : index
    %17 = vector.load %arg12[%c0_8, %c0_9] : memref<64x128xbf16, #tpu.memory_space<vmem>>, vector<64x128xbf16>
    %cst = arith.constant dense<0.000000e+00> : vector<256x128xf32>
    %18 = tpu.matmul %9, %17, %cst {dimension_numbers = #tpu.dot_dimension_numbers<[1], [0], [0], [1], [0, 0, 1, 1], [], []>} : vector<256x64xbf16>, vector<64x128xbf16>, vector<256x128xf32> -> vector<256x128xf32>
    %c0_10 = arith.constant 0 : index
    %c0_11 = arith.constant 0 : index
    %19 = vector.load %arg13[%c0_10, %c0_11] : memref<64x128xbf16, #tpu.memory_space<vmem>>, vector<64x128xbf16>
    %cst_12 = arith.constant dense<0.000000e+00> : vector<256x128xf32>
    %20 = tpu.matmul %16, %19, %cst_12 {dimension_numbers = #tpu.dot_dimension_numbers<[1], [0], [0], [1], [0, 0, 1, 1], [], []>} : vector<256x64xbf16>, vector<64x128xbf16>, vector<256x128xf32> -> vector<256x128xf32>
    %c0_13 = arith.constant 0 : index
    %c0_14 = arith.constant 0 : index
    %21 = vector.load %arg7[%c0_13, %c0_14] : memref<256x8xbf16, #tpu.memory_space<vmem>>, vector<256x8xbf16>
    %c0_15 = arith.constant 0 : index
    %c0_16 = arith.constant 0 : index
    %22 = vector.load %arg8[%c0_15, %c0_16] : memref<8x128xbf16, #tpu.memory_space<vmem>>, vector<8x128xbf16>
    %cst_17 = arith.constant dense<0.000000e+00> : vector<256x128xf32>
    %23 = tpu.matmul %21, %22, %cst_17 {dimension_numbers = #tpu.dot_dimension_numbers<[1], [0], [0], [1], [0, 0, 1, 1], [], []>} : vector<256x8xbf16>, vector<8x128xbf16>, vector<256x128xf32> -> vector<256x128xf32>
    %24 = arith.addf %18, %20 : vector<256x128xf32>
    %25 = arith.addf %24, %23 : vector<256x128xf32>
    %c0_18 = arith.constant 0 : index
    %c0_19 = arith.constant 0 : index
    %26 = vector.load %arg9[%c0_18, %c0_19] : memref<1x128xf32, #tpu.memory_space<vmem>>, vector<1x128xf32>
    %27 = vector.broadcast %26 : vector<1x128xf32> to vector<256x128xf32>
    %28 = arith.addf %25, %27 : vector<256x128xf32>
    %cst_20 = arith.constant 0.000000e+00 : f32
    %29 = vector.broadcast %cst_20 : f32 to vector<256x128xf32>
    %30 = arith.maximumf %28, %29 : vector<256x128xf32>
    %c0_21 = arith.constant 0 : index
    %c0_22 = arith.constant 0 : index
    %31 = vector.load %arg17[%c0_21, %c0_22] : memref<64x256xi32, #tpu.memory_space<vmem>>, vector<64x256xi32>
    %c0_23 = arith.constant 0 : index
    %c0_24 = arith.constant 0 : index
    %32 = vector.load %arg6[%c0_23, %c0_24] : memref<1x256xi32, #tpu.memory_space<vmem>>, vector<1x256xi32>
    %33 = vector.broadcast %32 : vector<1x256xi32> to vector<64x256xi32>
    %34 = arith.cmpi eq, %31, %33 : vector<64x256xi32>
    %35 = arith.extui %34 : vector<64x256xi1> to vector<64x256xi32>
    %36 = arith.sitofp %35 : vector<64x256xi32> to vector<64x256xf32>
    %37 = arith.truncf %36 : vector<64x256xf32> to vector<64x256xbf16>
    %c0_25 = arith.constant 0 : index
    %c0_26 = arith.constant 0 : index
    %38 = vector.load %arg15[%c0_25, %c0_26] : memref<64x128xf32, #tpu.memory_space<vmem>>, vector<64x128xf32>
    %39 = arith.truncf %30 : vector<256x128xf32> to vector<256x128xbf16>
    %cst_27 = arith.constant dense<0.000000e+00> : vector<64x128xf32>
    %40 = tpu.matmul %37, %39, %cst_27 {dimension_numbers = #tpu.dot_dimension_numbers<[1], [0], [0], [1], [0, 0, 1, 1], [], []>} : vector<64x256xbf16>, vector<256x128xbf16>, vector<64x128xf32> -> vector<64x128xf32>
    %41 = arith.addf %38, %40 : vector<64x128xf32>
    %c0_28 = arith.constant 0 : index
    %c0_29 = arith.constant 0 : index
    %42 = vector.load %arg15[%c0_28, %c0_29] : memref<64x128xf32, #tpu.memory_space<vmem>>, vector<64x128xf32>
    tpu.vector_store %arg15[%c0_28, %c0_29], %41 {strides = array<i32>} : memref<64x128xf32, #tpu.memory_space<vmem>>, vector<64x128xf32>,
    %c1_i32 = arith.constant 1 : i32
    %43 = arith.cmpi eq, %arg0, %c1_i32 : i32
    %44 = arith.extui %43 : i1 to i32
    %c0_i32_30 = arith.constant 0 : i32
    %45 = arith.cmpi ne, %44, %c0_i32_30 : i32
    scf.if %45 {
      %c0_31 = arith.constant 0 : index
      %c0_32 = arith.constant 0 : index
      %46 = vector.load %arg15[%c0_31, %c0_32] : memref<64x128xf32, #tpu.memory_space<vmem>>, vector<64x128xf32>
      %47 = arith.truncf %46 : vector<64x128xf32> to vector<64x128xbf16>
      %c0_33 = arith.constant 0 : index
      %c0_34 = arith.constant 0 : index
      %48 = vector.load %arg10[%c0_33, %c0_34] : memref<128x128xbf16, #tpu.memory_space<vmem>>, vector<128x128xbf16>
      %cst_35 = arith.constant dense<0.000000e+00> : vector<64x128xf32>
      %49 = tpu.matmul %47, %48, %cst_35 {dimension_numbers = #tpu.dot_dimension_numbers<[1], [0], [0], [1], [0, 0, 1, 1], [], []>} : vector<64x128xbf16>, vector<128x128xbf16>, vector<64x128xf32> -> vector<64x128xf32>
      %c0_36 = arith.constant 0 : index
      %c0_37 = arith.constant 0 : index
      %50 = vector.load %arg14[%c0_36, %c0_37] : memref<64x128xf32, #tpu.memory_space<vmem>>, vector<64x128xf32>
      %51 = arith.addf %50, %49 : vector<64x128xf32>
      %cst_38 = arith.constant 0.000000e+00 : f32
      %52 = vector.broadcast %cst_38 : f32 to vector<64x128xf32>
      %53 = arith.maximumf %51, %52 : vector<64x128xf32>
      %c0_39 = arith.constant 0 : index
      %c0_40 = arith.constant 0 : index
      %54 = vector.load %arg11[%c0_39, %c0_40] : memref<64x128xf32, #tpu.memory_space<vmem>>, vector<64x128xf32>
      tpu.vector_store %arg11[%c0_39, %c0_40], %53 {strides = array<i32>} : memref<64x128xf32, #tpu.memory_space<vmem>>, vector<64x128xf32>,
    } else {
    }
    return
  }
  func.func @transform_0(%arg0: i32) -> (i32, i32) {
    %c0_i32 = arith.constant 0 : i32
    %c0_i32_0 = arith.constant 0 : i32
    %c0_i32_1 = arith.constant 0 : i32
    return %c0_i32, %c0_i32_0 : i32, i32
  }
  func.func @transform_1(%arg0: i32) -> (i32, i32) {
    %c0_i32 = arith.constant 0 : i32
    %c0_i32_0 = arith.constant 0 : i32
    %c0_i32_1 = arith.constant 0 : i32
    return %c0_i32, %c0_i32_0 : i32, i32
  }
  func.func @transform_2(%arg0: i32) -> (i32, i32) {
    %c0_i32 = arith.constant 0 : i32
    %c0_i32_0 = arith.constant 0 : i32
    %c0_i32_1 = arith.constant 0 : i32
    return %c0_i32, %c0_i32_0 : i32, i32
  }
  func.func @transform_3(%arg0: i32) -> (i32, i32) {
    %c0_i32 = arith.constant 0 : i32
    %c0_i32_0 = arith.constant 0 : i32
    return %arg0, %c0_i32 : i32, i32
  }
  func.func @transform_4(%arg0: i32) -> (i32, i32) {
    %c0_i32 = arith.constant 0 : i32
    %c0_i32_0 = arith.constant 0 : i32
    return %arg0, %c0_i32 : i32, i32
  }
  func.func @transform_5(%arg0: i32) -> (i32, i32) {
    %c0_i32 = arith.constant 0 : i32
    %c0_i32_0 = arith.constant 0 : i32
    return %c0_i32, %arg0 : i32, i32
  }
  func.func @transform_6(%arg0: i32) -> (i32, i32) {
    %c0_i32 = arith.constant 0 : i32
    %c0_i32_0 = arith.constant 0 : i32
    return %arg0, %c0_i32 : i32, i32
  }
  func.func @transform_7(%arg0: i32) -> (i32, i32) {
    %c0_i32 = arith.constant 0 : i32
    %c0_i32_0 = arith.constant 0 : i32
    %c0_i32_1 = arith.constant 0 : i32
    return %c0_i32, %c0_i32_0 : i32, i32
  }
  func.func @transform_8(%arg0: i32) -> (i32, i32) {
    %c0_i32 = arith.constant 0 : i32
    %c0_i32_0 = arith.constant 0 : i32
    %c0_i32_1 = arith.constant 0 : i32
    return %c0_i32, %c0_i32_0 : i32, i32
  }
  func.func @transform_9(%arg0: i32) -> (i32, i32) {
    %c0_i32 = arith.constant 0 : i32
    %c0_i32_0 = arith.constant 0 : i32
    %c0_i32_1 = arith.constant 0 : i32
    return %c0_i32, %c0_i32_0 : i32, i32
  }
  func.func @transform_10(%arg0: i32) -> (i32, i32) {
    %c0_i32 = arith.constant 0 : i32
    %c0_i32_0 = arith.constant 0 : i32
    %c0_i32_1 = arith.constant 0 : i32
    return %c0_i32, %c0_i32_0 : i32, i32
  }
}

</mosaic_0001>

<llo_original>
// kernel: scene_construction_forward.1
$region0: #{scene_construction_forward.1}
  #allocation0 [shape = 'u32[]', space=smem, size = 0x4, offset = 0x4, fixed_abs, tag = 'smem constant byte address 0x4 - core index']
  #allocation1 [shape = 'u32[144,128]{1,0:T(1,128)}', space=vmem, size = 0x12000, scoped, tag = 'internal scratch']
  #allocation2 [shape = 'bf16[64,128]{1,0:T(16,128)(2,1)}', space=vmem, size = 0x4000, scoped, tag = 'scratch operand']
  #allocation3 [shape = 'bf16[64,128]{1,0:T(16,128)(2,1)}', space=vmem, size = 0x4000, scoped, tag = 'scratch operand']
  #allocation4 [shape = 'f32[64,128]{1,0:T(8,128)}', space=vmem, size = 0x8000, scoped, tag = 'scratch operand']
  #allocation5 [shape = 'f32[64,128]{1,0:T(8,128)}', space=vmem, size = 0x8000, scoped, tag = 'scratch operand']
  #allocation6 [shape = 's32[256,64]{1,0:T(8,128)}', space=vmem, size = 0x20000, scoped, tag = 'scratch operand']
  #allocation7 [shape = 's32[64,256]{1,0:T(8,128)}', space=vmem, size = 0x10000, scoped, tag = 'scratch operand']
  %s0 = inlined_call_operand.vmem [shape: bf16[64,16], index: 0, kind: input, shape index: {}]
  %s1 = inlined_call_operand.vmem [shape: bf16[16,384], index: 1, kind: input, shape index: {}]
  %s2 = inlined_call_operand.vmem [shape: f32[1,128], index: 2, kind: input, shape index: {}]
  %s3 = inlined_call_operand.vmem [shape: s32[512,1], index: 3, kind: input, shape index: {}]
  %s4 = inlined_call_operand.vmem [shape: s32[512,1], index: 4, kind: input, shape index: {}]
  %s5 = inlined_call_operand.vmem [shape: s32[1,512], index: 5, kind: input, shape index: {}]
  %s6 = inlined_call_operand.vmem [shape: bf16[512,8], index: 6, kind: input, shape index: {}]
  %s7 = inlined_call_operand.vmem [shape: bf16[8,128], index: 7, kind: input, shape index: {}]
  %s8 = inlined_call_operand.vmem [shape: f32[1,128], index: 8, kind: input, shape index: {}]
  %s9 = inlined_call_operand.vmem [shape: bf16[128,128], index: 9, kind: input, shape index: {}]
  %s10 = inlined_call_operand.hbm [shape: f32[64,128], index: 10, kind: output, shape index: {}]
  %s11 = sld [smem:[#allocation0]]
  $region81: #{scene_construction_forward.1} parent=0
    _
  %s13 = ssub.s32 1, %s11
  %s14 = scalar_select 0, %s13, %s11
  $region1: #{scene_construction_forward.1} parent=0
    #allocation8 [shape = 'u8[32768]{0}', space=vmem, size = 0x8000, scoped, tag = 'output window, operand 0, single buffered']
    #allocation9 [shape = 's32[2]{0}', space=sflag, size = 0x8, scoped, tag = 'scoped memory for scene_construction_forward.1']
    %15 = vsyncpa [#allocation9], 0
    loop: start=0, step=1, limit=4
    $region2: #{scene_construction_forward.1} parent=1 // loop_pre_header
      _
    $region3: #{scene_construction_forward.1} parent=1 // loop_header
      %s17 = sphi 0, %s21
      %p18 = scmp.ge.s32.totalorder %s17, 4
      %s25 = sphi 0, %s25
      %s27 = sphi 0, %s25
      %s28 = sphi 0, %s27
      %s42 = sphi 0, %s28
      %s46 = sphi 0, %s46
      %s48 = sphi 0, %s46
      %s49 = sphi 0, %s48
      %s63 = sphi 0, %s49
      %s67 = sphi 0, %s67
      %s69 = sphi 0, %s67
      %s70 = sphi 0, %s69
      %s84 = sphi 0, %s70
      %s90 = sphi 0, %s92
      %s93 = sphi 0, %s90
      %s94 = sphi 0, %s93
      %s110 = sphi 0, %s94
      %s116 = sphi 0, %s118
      %s119 = sphi 0, %s116
      %s120 = sphi 0, %s119
      %s136 = sphi 0, %s120
      %s142 = sphi 0, %s144
      %s145 = sphi 0, %s142
      %s146 = sphi 0, %s145
      %s162 = sphi 0, %s146
      %s168 = sphi 0, %s170
      %s171 = sphi 0, %s168
      %s172 = sphi 0, %s171
      %s188 = sphi 0, %s172
      %s192 = sphi 0, %s192
      %s194 = sphi 0, %s192
      %s195 = sphi 0, %s194
      %s209 = sphi 0, %s195
      %s213 = sphi 0, %s213
      %s215 = sphi 0, %s213
      %s216 = sphi 0, %s215
      %s230 = sphi 0, %s216
      %s234 = sphi 0, %s234
      %s236 = sphi 0, %s234
      %s237 = sphi 0, %s236
      %s251 = sphi 0, %s237
      %s255 = sphi 0, %s255
      %s257 = sphi 0, %s255
      %s258 = sphi 0, %s257
      %s272 = sphi 0, %s258
    $region4: #{scene_construction_forward.1} parent=1 // loop_header_branch
      %20 = sbr.rel (%p18) target = $region8
    $region5: #{scene_construction_forward.1} parent=1 // loop_body
      %s22 = ssub.s32 %s17, 1
      %s23 = ssub.s32 %s17, 2
      %s24 = sadd.s32 %s17, 1
      %s26 = sadd.s32 %s25, 1
      %p29 = scmp.eq.s32.totalorder %s17, 1
      %p30 = scmp.ne.s32.totalorder %s25, %s27
      %p31 = scmp.eq.s32.totalorder %s17, 0
      %p32 = por %p30, %p31
      %p33 = scmp.ne.s32.totalorder %s25, %s27
      %p34 = scmp.eq.s32.totalorder %s22, 1
      %p35 = por %p33, %p34
      %p36 = scmp.ne.s32.totalorder %s27, %s28
      %p37 = scmp.eq.s32.totalorder %s22, 0
      %p38 = por %p36, %p37
      %p39 = scmp.ne.s32.totalorder %s27, %s28
      %p40 = scmp.eq.s32.totalorder %s23, 1
      %p41 = por %p39, %p40
      %p43 = scmp.ne.s32.totalorder %s28, %s42
      %p44 = scmp.eq.s32.totalorder %s23, 0
      %p45 = por %p43, %p44
      %s47 = sadd.s32 %s46, 1
      %p50 = scmp.eq.s32.totalorder %s17, 1
      %p51 = scmp.ne.s32.totalorder %s46, %s48
      %p52 = scmp.eq.s32.totalorder %s17, 0
      %p53 = por %p51, %p52
      %p54 = scmp.ne.s32.totalorder %s46, %s48
      %p55 = scmp.eq.s32.totalorder %s22, 1
      %p56 = por %p54, %p55
      %p57 = scmp.ne.s32.totalorder %s48, %s49
      %p58 = scmp.eq.s32.totalorder %s22, 0
      %p59 = por %p57, %p58
      %p60 = scmp.ne.s32.totalorder %s48, %s49
      %p61 = scmp.eq.s32.totalorder %s23, 1
      %p62 = por %p60, %p61
      %p64 = scmp.ne.s32.totalorder %s49, %s63
      %p65 = scmp.eq.s32.totalorder %s23, 0
      %p66 = por %p64, %p65
      %s68 = sadd.s32 %s67, 1
      %p71 = scmp.eq.s32.totalorder %s17, 1
      %p72 = scmp.ne.s32.totalorder %s67, %s69
      %p73 = scmp.eq.s32.totalorder %s17, 0
      %p74 = por %p72, %p73
      %p75 = scmp.ne.s32.totalorder %s67, %s69
      %p76 = scmp.eq.s32.totalorder %s22, 1
      %p77 = por %p75, %p76
      %p78 = scmp.ne.s32.totalorder %s69, %s70
      %p79 = scmp.eq.s32.totalorder %s22, 0
      %p80 = por %p78, %p79
      %p81 = scmp.ne.s32.totalorder %s69, %s70
      %p82 = scmp.eq.s32.totalorder %s23, 1
      %p83 = por %p81, %p82
      %p85 = scmp.ne.s32.totalorder %s70, %s84
      %p86 = scmp.eq.s32.totalorder %s23, 0
      %p87 = por %p85, %p86
      %s88 = ssub.s32 %s17, %s24
      %p89 = scmp.eq.s32.totalorder %s88, 0
      %s91 = sadd.s32 %s90, 1
      %s92 = scalar_select %p89, %s90, %s91
      %p95 = pneg %p89
      %p96 = scmp.eq.s32.totalorder %s17, 1
      %p97 = por %p95, %p96
      %p98 = scmp.ne.s32.totalorder %s90, %s93
      %p99 = scmp.eq.s32.totalorder %s17, 0
      %p100 = por %p98, %p99
      %p101 = scmp.ne.s32.totalorder %s90, %s93
      %p102 = scmp.eq.s32.totalorder %s22, 1
      %p103 = por %p101, %p102
      %p104 = scmp.ne.s32.totalorder %s93, %s94
      %p105 = scmp.eq.s32.totalorder %s22, 0
      %p106 = por %p104, %p105
      %p107 = scmp.ne.s32.totalorder %s93, %s94
      %p108 = scmp.eq.s32.totalorder %s23, 1
      %p109 = por %p107, %p108
      %p111 = scmp.ne.s32.totalorder %s94, %s110
      %p112 = scmp.eq.s32.totalorder %s23, 0
      %p113 = por %p111, %p112
      %s114 = ssub.s32 %s17, %s24
      %p115 = scmp.eq.s32.totalorder %s114, 0
      %s117 = sadd.s32 %s116, 1
      %s118 = scalar_select %p115, %s116, %s117
      %p121 = pneg %p115
      %p122 = scmp.eq.s32.totalorder %s17, 1
      %p123 = por %p121, %p122
      %p124 = scmp.ne.s32.totalorder %s116, %s119
      %p125 = scmp.eq.s32.totalorder %s17, 0
      %p126 = por %p124, %p125
      %p127 = scmp.ne.s32.totalorder %s116, %s119
      %p128 = scmp.eq.s32.totalorder %s22, 1
      %p129 = por %p127, %p128
      %p130 = scmp.ne.s32.totalorder %s119, %s120
      %p131 = scmp.eq.s32.totalorder %s22, 0
      %p132 = por %p130, %p131
      %p133 = scmp.ne.s32.totalorder %s119, %s120
      %p134 = scmp.eq.s32.totalorder %s23, 1
      %p135 = por %p133, %p134
      %p137 = scmp.ne.s32.totalorder %s120, %s136
      %p138 = scmp.eq.s32.totalorder %s23, 0
      %p139 = por %p137, %p138
      %s140 = ssub.s32 %s17, %s24
      %p141 = scmp.eq.s32.totalorder %s140, 0
      %s143 = sadd.s32 %s142, 1
      %s144 = scalar_select %p141, %s142, %s143
      %p147 = pneg %p141
      %p148 = scmp.eq.s32.totalorder %s17, 1
      %p149 = por %p147, %p148
      %p150 = scmp.ne.s32.totalorder %s142, %s145
      %p151 = scmp.eq.s32.totalorder %s17, 0
      %p152 = por %p150, %p151
      %p153 = scmp.ne.s32.totalorder %s142, %s145
      %p154 = scmp.eq.s32.totalorder %s22, 1
      %p155 = por %p153, %p154
      %p156 = scmp.ne.s32.totalorder %s145, %s146
      %p157 = scmp.eq.s32.totalorder %s22, 0
      %p158 = por %p156, %p157
      %p159 = scmp.ne.s32.totalorder %s145, %s146
      %p160 = scmp.eq.s32.totalorder %s23, 1
      %p161 = por %p159, %p160
      %p163 = scmp.ne.s32.totalorder %s146, %s162
      %p164 = scmp.eq.s32.totalorder %s23, 0
      %p165 = por %p163, %p164
      %s166 = ssub.s32 %s17, %s24
      %p167 = scmp.eq.s32.totalorder %s166, 0
      %s169 = sadd.s32 %s168, 1
      %s170 = scalar_select %p167, %s168, %s169
      %p173 = pneg %p167
      %p174 = scmp.eq.s32.totalorder %s17, 1
      %p175 = por %p173, %p174
      %p176 = scmp.ne.s32.totalorder %s168, %s171
      %p177 = scmp.eq.s32.totalorder %s17, 0
      %p178 = por %p176, %p177
      %p179 = scmp.ne.s32.totalorder %s168, %s171
      %p180 = scmp.eq.s32.totalorder %s22, 1
      %p181 = por %p179, %p180
      %p182 = scmp.ne.s32.totalorder %s171, %s172
      %p183 = scmp.eq.s32.totalorder %s22, 0
      %p184 = por %p182, %p183
      %p185 = scmp.ne.s32.totalorder %s171, %s172
      %p186 = scmp.eq.s32.totalorder %s23, 1
      %p187 = por %p185, %p186
      %p189 = scmp.ne.s32.totalorder %s172, %s188
      %p190 = scmp.eq.s32.totalorder %s23, 0
      %p191 = por %p189, %p190
      %s193 = sadd.s32 %s192, 1
      %p196 = scmp.eq.s32.totalorder %s17, 1
      %p197 = scmp.ne.s32.totalorder %s192, %s194
      %p198 = scmp.eq.s32.totalorder %s17, 0
      %p199 = por %p197, %p198
      %p200 = scmp.ne.s32.totalorder %s192, %s194
      %p201 = scmp.eq.s32.totalorder %s22, 1
      %p202 = por %p200, %p201
      %p203 = scmp.ne.s32.totalorder %s194, %s195
      %p204 = scmp.eq.s32.totalorder %s22, 0
      %p205 = por %p203, %p204
      %p206 = scmp.ne.s32.totalorder %s194, %s195
      %p207 = scmp.eq.s32.totalorder %s23, 1
      %p208 = por %p206, %p207
      %p210 = scmp.ne.s32.totalorder %s195, %s209
      %p211 = scmp.eq.s32.totalorder %s23, 0
      %p212 = por %p210, %p211
      %s214 = sadd.s32 %s213, 1
      %p217 = scmp.eq.s32.totalorder %s17, 1
      %p218 = scmp.ne.s32.totalorder %s213, %s215
      %p219 = scmp.eq.s32.totalorder %s17, 0
      %p220 = por %p218, %p219
      %p221 = scmp.ne.s32.totalorder %s213, %s215
      %p222 = scmp.eq.s32.totalorder %s22, 1
      %p223 = por %p221, %p222
      %p224 = scmp.ne.s32.totalorder %s215, %s216
      %p225 = scmp.eq.s32.totalorder %s22, 0
      %p226 = por %p224, %p225
      %p227 = scmp.ne.s32.totalorder %s215, %s216
      %p228 = scmp.eq.s32.totalorder %s23, 1
      %p229 = por %p227, %p228
      %p231 = scmp.ne.s32.totalorder %s216, %s230
      %p232 = scmp.eq.s32.totalorder %s23, 0
      %p233 = por %p231, %p232
      %s235 = sadd.s32 %s234, 1
      %p238 = scmp.eq.s32.totalorder %s17, 1
      %p239 = scmp.ne.s32.totalorder %s234, %s236
      %p240 = scmp.eq.s32.totalorder %s17, 0
      %p241 = por %p239, %p240
      %p242 = scmp.ne.s32.totalorder %s234, %s236
      %p243 = scmp.eq.s32.totalorder %s22, 1
      %p244 = por %p242, %p243
      %p245 = scmp.ne.s32.totalorder %s236, %s237
      %p246 = scmp.eq.s32.totalorder %s22, 0
      %p247 = por %p245, %p246
      %p248 = scmp.ne.s32.totalorder %s236, %s237
      %p249 = scmp.eq.s32.totalorder %s23, 1
      %p250 = por %p248, %p249
      %p252 = scmp.ne.s32.totalorder %s237, %s251
      %p253 = scmp.eq.s32.totalorder %s23, 0
      %p254 = por %p252, %p253
      %s256 = sadd.s32 %s255, 1
      %p259 = scmp.eq.s32.totalorder %s17, 1
      %p260 = scmp.ne.s32.totalorder %s255, %s257
      %p261 = scmp.eq.s32.totalorder %s17, 0
      %p262 = por %p260, %p261
      %p263 = scmp.ne.s32.totalorder %s255, %s257
      %p264 = scmp.eq.s32.totalorder %s22, 1
      %p265 = por %p263, %p264
      %p266 = scmp.ne.s32.totalorder %s257, %s258
      %p267 = scmp.eq.s32.totalorder %s22, 0
      %p268 = por %p266, %p267
      %p269 = scmp.ne.s32.totalorder %s257, %s258
      %p270 = scmp.eq.s32.totalorder %s23, 1
      %p271 = por %p269, %p270
      %p273 = scmp.ne.s32.totalorder %s258, %s272
      %p274 = scmp.eq.s32.totalorder %s23, 0
      %p275 = por %p273, %p274
      %p276 = scmp.le.s32.totalorder 1, %s17
      %p277 = scmp.lt.s32.totalorder %s17, 3
      %p278 = pnand %p276, %p277
      %p279 = pneg %p278
      // Predicated region
      $region9: #{scene_construction_forward.1} parent=5 // pred_check
        _
      $region10: #{scene_construction_forward.1} parent=5 // pred_check_branch
        %281 = sbr.rel (%p278) target = $region12
      $region11: #{scene_construction_forward.1} parent=5 // pred_region
        %s282 = ssub.s32 %s17, 1
        // Predicated region
        $region13: #{scene_construction_forward.1} parent=11 // pred_check
          %p283 = pneg %p38
        $region14: #{scene_construction_forward.1} parent=11 // pred_check_branch
          %285 = sbr.rel (%p283) target = $region16
        $region15: #{scene_construction_forward.1} parent=11 // pred_region
          _
        $region16: #{scene_construction_forward.1} parent=11 // pred_fallthru
          _
        // Predicated region
        $region17: #{scene_construction_forward.1} parent=11 // pred_check
          %p286 = pneg %p59
        $region18: #{scene_construction_forward.1} parent=11 // pred_check_branch
          %288 = sbr.rel (%p286) target = $region20
        $region19: #{scene_construction_forward.1} parent=11 // pred_region
          _
        $region20: #{scene_construction_forward.1} parent=11 // pred_fallthru
          _
        // Predicated region
        $region21: #{scene_construction_forward.1} parent=11 // pred_check
          %p289 = pneg %p80
        $region22: #{scene_construction_forward.1} parent=11 // pred_check_branch
          %291 = sbr.rel (%p289) target = $region24
        $region23: #{scene_construction_forward.1} parent=11 // pred_region
          _
        $region24: #{scene_construction_forward.1} parent=11 // pred_fallthru
          _
        // Predicated region
        $region25: #{scene_construction_forward.1} parent=11 // pred_check
          %p292 = pneg %p205
        $region26: #{scene_construction_forward.1} parent=11 // pred_check_branch
          %294 = sbr.rel (%p292) target = $region28
        $region27: #{scene_construction_forward.1} parent=11 // pred_region
          _
        $region28: #{scene_construction_forward.1} parent=11 // pred_fallthru
          _
        // Predicated region
        $region29: #{scene_construction_forward.1} parent=11 // pred_check
          %p295 = pneg %p226
        $region30: #{scene_construction_forward.1} parent=11 // pred_check_branch
          %297 = sbr.rel (%p295) target = $region32
        $region31: #{scene_construction_forward.1} parent=11 // pred_region
          _
        $region32: #{scene_construction_forward.1} parent=11 // pred_fallthru
          _
        // Predicated region
        $region33: #{scene_construction_forward.1} parent=11 // pred_check
          %p298 = pneg %p247
        $region34: #{scene_construction_forward.1} parent=11 // pred_check_branch
          %300 = sbr.rel (%p298) target = $region36
        $region35: #{scene_construction_forward.1} parent=11 // pred_region
          _
        $region36: #{scene_construction_forward.1} parent=11 // pred_fallthru
          _
      $region12: #{scene_construction_forward.1} parent=5 // pred_fallthru
        _
      %p301 = scmp.lt.s32.totalorder %s17, 2
      // Predicated region
      $region37: #{scene_construction_forward.1} parent=5 // pred_check
        %p302 = pneg %p301
      $region38: #{scene_construction_forward.1} parent=5 // pred_check_branch
        %304 = sbr.rel (%p302) target = $region40
      $region39: #{scene_construction_forward.1} parent=5 // pred_region
        // Predicated region
        $region41: #{scene_construction_forward.1} parent=39 // pred_check
          %p305 = pneg %p100
        $region42: #{scene_construction_forward.1} parent=39 // pred_check_branch
          %307 = sbr.rel (%p305) target = $region44
        $region43: #{scene_construction_forward.1} parent=39 // pred_region
          %s308 = smul.u32 32, %s17
          %p309 = scmp.lt.s32.totalorder %s308, 63
          %s310 = scalar_select %p309, %s308, 63
          %s311 = smul.addr %s310, 8
          %s312 = scalar_lea.vmem %s3, %s311
          %s313 = smul.u32 32, %s17
        $region44: #{scene_construction_forward.1} parent=39 // pred_fallthru
          _
        // Predicated region
        $region45: #{scene_construction_forward.1} parent=39 // pred_check
          %p314 = pneg %p126
        $region46: #{scene_construction_forward.1} parent=39 // pred_check_branch
          %316 = sbr.rel (%p314) target = $region48
        $region47: #{scene_construction_forward.1} parent=39 // pred_region
          %s317 = smul.u32 32, %s17
          %p318 = scmp.lt.s32.totalorder %s317, 63
          %s319 = scalar_select %p318, %s317, 63
          %s320 = smul.addr %s319, 8
          %s321 = scalar_lea.vmem %s4, %s320
          %s322 = smul.u32 32, %s17
        $region48: #{scene_construction_forward.1} parent=39 // pred_fallthru
          _
        // Predicated region
        $region49: #{scene_construction_forward.1} parent=39 // pred_check
          %p323 = pneg %p152
        $region50: #{scene_construction_forward.1} parent=39 // pred_check_branch
          %325 = sbr.rel (%p323) target = $region52
        $region51: #{scene_construction_forward.1} parent=39 // pred_region
          %s326 = smul.u32 2, %s17
          %p327 = scmp.lt.s32.totalorder %s326, 3
          %s328 = scalar_select %p327, %s326, 3
          %s329 = scalar_lea.vmem %s5, %s328
          %s330 = smul.u32 2, %s17
        $region52: #{scene_construction_forward.1} parent=39 // pred_fallthru
          _
        // Predicated region
        $region53: #{scene_construction_forward.1} parent=39 // pred_check
          %p331 = pneg %p178
        $region54: #{scene_construction_forward.1} parent=39 // pred_check_branch
          %333 = sbr.rel (%p331) target = $region56
        $region55: #{scene_construction_forward.1} parent=39 // pred_region
          %s334 = smul.u32 32, %s17
          %p335 = scmp.lt.s32.totalorder %s334, 63
          %s336 = scalar_select %p335, %s334, 63
          %s337 = smul.addr %s336, 4
          %s338 = scalar_lea.vmem %s6, %s337
          %s339 = smul.u32 32, %s17
        $region56: #{scene_construction_forward.1} parent=39 // pred_fallthru
          _
      $region40: #{scene_construction_forward.1} parent=5 // pred_fallthru
        _
      %p340 = scmp.le.s32.totalorder 1, %s17
      %p341 = scmp.lt.s32.totalorder %s17, 3
      %p342 = pnand %p340, %p341
      %p343 = pneg %p342
      // Predicated region
      $region57: #{scene_construction_forward.1} parent=5 // pred_check
        _
      $region58: #{scene_construction_forward.1} parent=5 // pred_check_branch
        %345 = sbr.rel (%p342) target = $region60
      $region59: #{scene_construction_forward.1} parent=5 // pred_region
        %s346 = ssub.s32 %s17, 1
        %p347 = pneg %p38
        %p348 = pneg %p35
        %p349 = pneg %p59
        %p350 = pneg %p56
        %p351 = pneg %p80
        %p352 = pneg %p77
        %s353 = smul.u32 32, %s22
        %p354 = scmp.lt.s32.totalorder %s353, 63
        %s355 = scalar_select %p354, %s353, 63
        %s356 = smul.addr %s355, 8
        %s357 = scalar_lea.vmem %s3, %s356
        %p358 = pneg %p106
        %p359 = pneg %p103
        %s360 = smul.u32 32, %s22
        %p361 = scmp.lt.s32.totalorder %s360, 63
        %s362 = scalar_select %p361, %s360, 63
        %s363 = smul.addr %s362, 8
        %s364 = scalar_lea.vmem %s4, %s363
        %p365 = pneg %p132
        %p366 = pneg %p129
        %s367 = smul.u32 2, %s22
        %p368 = scmp.lt.s32.totalorder %s367, 3
        %s369 = scalar_select %p368, %s367, 3
        %s370 = scalar_lea.vmem %s5, %s369
        %p371 = pneg %p158
        %p372 = pneg %p155
        %s373 = smul.u32 32, %s22
        %p374 = scmp.lt.s32.totalorder %s373, 63
        %s375 = scalar_select %p374, %s373, 63
        %s376 = smul.addr %s375, 4
        %s377 = scalar_lea.vmem %s6, %s376
        %p378 = pneg %p184
        %p379 = pneg %p181
        %p380 = pneg %p205
        %p381 = pneg %p202
        %p382 = pneg %p226
        %p383 = pneg %p223
        %p384 = pneg %p247
        %p385 = pneg %p244
        %p386 = pneg %p268
        %p387 = pneg %p265
        %s388 = smul.u32 32, %s22
        %p389 = scmp.lt.s32.totalorder %s388, 63
        %s390 = scalar_select %p389, %s388, 63
        %s391 = smul.addr %s390, 8
        %s392 = scalar_lea.vmem %s3, %s391
        %s393 = smul.u32 32, %s22
        %s394 = smul.u32 32, %s22
        %p395 = scmp.lt.s32.totalorder %s394, 63
        %s396 = scalar_select %p395, %s394, 63
        %s397 = smul.addr %s396, 8
        %s398 = scalar_lea.vmem %s4, %s397
        %s399 = smul.u32 32, %s22
        %s400 = smul.u32 2, %s22
        %p401 = scmp.lt.s32.totalorder %s400, 3
        %s402 = scalar_select %p401, %s400, 3
        %s403 = scalar_lea.vmem %s5, %s402
        %s404 = smul.u32 2, %s22
        %s405 = smul.u32 32, %s22
        %p406 = scmp.lt.s32.totalorder %s405, 63
        %s407 = scalar_select %p406, %s405, 63
        %s408 = smul.addr %s407, 4
        %s409 = scalar_lea.vmem %s6, %s408
        %s410 = smul.u32 32, %s22
        %p412 = scmp.eq.s32.totalorder %s22, 0
        // Predicated region
        $region61: #{scene_construction_forward.1} parent=59 // pred_check
          %p413 = pneg %p412
        $region62: #{scene_construction_forward.1} parent=59 // pred_check_branch
          %415 = sbr.rel (%p413) target = $region64
        $region63: #{scene_construction_forward.1} parent=59 // pred_region
          %v416 = vld [vmem:[%s0] sm:$0xf]
          %v417 = vld [vmem:[%s0 + $0x4] sm:$0xf]
          %v418 = vld [vmem:[%s0 + $0x8] sm:$0xf]
          %v419 = vld [vmem:[%s0 + $0xc] sm:$0xf]
          %v420 = vld [vmem:[%s0 + $0x10] sm:$0xf]
          %v421 = vld [vmem:[%s0 + $0x14] sm:$0xf]
          %v422 = vld [vmem:[%s0 + $0x18] sm:$0xf]
          %v423 = vld [vmem:[%s0 + $0x1c] sm:$0xf]
          %v424 = vld [vmem:[%s1] sm:$0xff]
          %v425 = vld [vmem:[%s1 + $0x8] sm:$0xf]
          %v426 = vld [vmem:[%s1 + $0xc] sm:$0xff]
          %v427 = vld [vmem:[%s1 + $0x14] sm:$0xf]
          %v436 = vunpack.c.l.b16 %v416
          %v437 = vunpack.c.l.b16 %v417
          %v438 = vunpack.c.l.b16 %v418
          %v439 = vunpack.c.l.b16 %v419
          %v440 = vunpack.c.l.b16 %v420
          %v441 = vunpack.c.l.b16 %v421
          %v442 = vunpack.c.l.b16 %v422
          %v443 = vunpack.c.l.b16 %v423
          %v444 = vpack.c.b16 %v437, %v436
          %v445 = vpack.c.b16 %v439, %v438
          %v446 = vpack.c.b16 %v441, %v440
          %v447 = vpack.c.b16 %v443, %v442
          %v452 = vunpack.c.l.b16 %v424
          %v453 = vunpack.c.h.b16 %v424
          %v454 = vunpack.c.l.b16 %v425
          %v455 = vunpack.c.l.b16 %v426
          %v456 = vunpack.c.h.b16 %v426
          %v457 = vunpack.c.l.b16 %v427
          %v458 = vpack.c.b16 %v455, %v452
          %v459 = vpack.c.b16 %v456, %v453
          %v460 = vpack.c.b16 %v457, %v454
          %vm464 = vcmask 130048
          %v466 = vsel %vm464, %v444, 0
          %v469 = vsel %vm464, %v445, 0
          %v472 = vsel %vm464, %v446, 0
          %v475 = vsel %vm464, %v447, 0
          %477 = vmatprep.subr.bf16.mxu0 %v459
          %478 = vmatpush1.bf16.msra.mxu0 %v458
          %479 = vmatprep.subr.bf16.mxu0 0
          %480 = vmatpush1.bf16.msra.mxu0 0
          %481 = vmatprep.subr.bf16.mxu0 0
          %482 = vmatpush1.bf16.msra.mxu0 0
          %483 = vmatprep.subr.bf16.mxu0 0
          %484 = vmatpush1.bf16.msra.mxu0 0
          %485 = vmatprep.subr.bf16.mxu0 0
          %486 = vmatpush1.bf16.msra.mxu0 0
          %487 = vmatprep.subr.bf16.mxu0 0
          %488 = vmatpush1.bf16.msra.mxu0 0
          %489 = vmatprep.subr.bf16.mxu0 0
          %490 = vmatpush1.bf16.msra.mxu0 0
          %491 = vmatprep.subr.bf16.mxu0 0
          %492 = vmatpush1.bf16.msra.mxu0 0
          %493 = vmatprep.subr.bf16.mxu0 0
          %494 = vmatpush1.bf16.msra.mxu0 0
          %495 = vmatprep.subr.bf16.mxu0 0
          %496 = vmatpush1.bf16.msra.mxu0 0
          %497 = vmatprep.subr.bf16.mxu0 0
          %498 = vmatpush1.bf16.msra.mxu0 0
          %499 = vmatprep.subr.bf16.mxu0 0
          %500 = vmatpush1.bf16.msra.mxu0 0
          %501 = vmatprep.subr.bf16.mxu0 0
          %502 = vmatpush1.bf16.msra.mxu0 0
          %503 = vmatprep.subr.bf16.mxu0 0
          %504 = vmatpush1.bf16.msra.mxu0 0
          %505 = vmatprep.subr.bf16.mxu0 0
          %506 = vmatpush1.bf16.msra.mxu0 0
          %507 = vmatprep.subr.bf16.mxu0 0
          %508 = vmatpush1.bf16.msra.mxu0 0
          %509 = vmatprep.mubr.bf16.mxu0 0
          %510 = vmatmul.mubr.bf16.gmra.mrb[0].mxu0 %v466
          %v511 = vpop.f32.mrb[0].mxu0
          %v512 = vadd.f32 0.0, %v511
          %v513 = vpop.f32.mrb[0].mxu0
          %v514 = vadd.f32 0.0, %v513
          %v515 = vpop.f32.mrb[0].mxu0
          %v516 = vadd.f32 0.0, %v515
          %v517 = vpop.f32.mrb[0].mxu0
          %v518 = vadd.f32 0.0, %v517
          %519 = vmatprep.mubr.bf16.mxu0 0
          %520 = vmatmul.mubr.bf16.gmra.mrb[0].mxu0 %v469
          %v521 = vpop.f32.mrb[0].mxu0
          %v522 = vadd.f32 0.0, %v521
          %v523 = vpop.f32.mrb[0].mxu0
          %v524 = vadd.f32 0.0, %v523
          %v525 = vpop.f32.mrb[0].mxu0
          %v526 = vadd.f32 0.0, %v525
          %v527 = vpop.f32.mrb[0].mxu0
          %v528 = vadd.f32 0.0, %v527
          %529 = vmatprep.mubr.bf16.mxu0 0
          %530 = vmatmul.mubr.bf16.gmra.mrb[0].mxu0 %v472
          %v531 = vpop.f32.mrb[0].mxu0
          %v532 = vadd.f32 0.0, %v531
          %v533 = vpop.f32.mrb[0].mxu0
          %v534 = vadd.f32 0.0, %v533
          %v535 = vpop.f32.mrb[0].mxu0
          %v536 = vadd.f32 0.0, %v535
          %v537 = vpop.f32.mrb[0].mxu0
          %v538 = vadd.f32 0.0, %v537
          %539 = vmatprep.mubr.bf16.mxu0 0
          %540 = vmatmul.mubr.bf16.gmra.mrb[0].mxu0 %v475
          %v541 = vpop.f32.mrb[0].mxu0
          %v542 = vadd.f32 0.0, %v541
          %v543 = vpop.f32.mrb[0].mxu0
          %v544 = vadd.f32 0.0, %v543
          %v545 = vpop.f32.mrb[0].mxu0
          %v546 = vadd.f32 0.0, %v545
          %v547 = vpop.f32.mrb[0].mxu0
          %v548 = vadd.f32 0.0, %v547
          %549 = vdwg.mxu0
          %550 = vmatprep.subr.bf16.mxu0 0
          %551 = vmatpush1.bf16.msra.mxu0 %v460
          %552 = vmatprep.subr.bf16.mxu0 0
          %553 = vmatpush1.bf16.msra.mxu0 0
          %554 = vmatprep.subr.bf16.mxu0 0
          %555 = vmatpush1.bf16.msra.mxu0 0
          %556 = vmatprep.subr.bf16.mxu0 0
          %557 = vmatpush1.bf16.msra.mxu0 0
          %558 = vmatprep.subr.bf16.mxu0 0
          %559 = vmatpush1.bf16.msra.mxu0 0
          %560 = vmatprep.subr.bf16.mxu0 0
          %561 = vmatpush1.bf16.msra.mxu0 0
          %562 = vmatprep.subr.bf16.mxu0 0
          %563 = vmatpush1.bf16.msra.mxu0 0
          %564 = vmatprep.subr.bf16.mxu0 0
          %565 = vmatpush1.bf16.msra.mxu0 0
          %566 = vmatprep.subr.bf16.mxu0 0
          %567 = vmatpush1.bf16.msra.mxu0 0
          %568 = vmatprep.subr.bf16.mxu0 0
          %569 = vmatpush1.bf16.msra.mxu0 0
          %570 = vmatprep.subr.bf16.mxu0 0
          %571 = vmatpush1.bf16.msra.mxu0 0
          %572 = vmatprep.subr.bf16.mxu0 0
          %573 = vmatpush1.bf16.msra.mxu0 0
          %574 = vmatprep.subr.bf16.mxu0 0
          %575 = vmatpush1.bf16.msra.mxu0 0
          %576 = vmatprep.subr.bf16.mxu0 0
          %577 = vmatpush1.bf16.msra.mxu0 0
          %578 = vmatprep.subr.bf16.mxu0 0
          %579 = vmatpush1.bf16.msra.mxu0 0
          %580 = vmatprep.subr.bf16.mxu0 0
          %581 = vmatpush1.bf16.msra.mxu0 0
          %582 = vmatprep.mubr.bf16.mxu0 0
          %583 = vmatmul.mubr.bf16.gmra.mrb[0].mxu0 %v466
          %v584 = vpop.f32.mrb[0].mxu0
          %v585 = vadd.f32 0.0, %v584
          %v586 = vpop.f32.mrb[0].mxu0
          %v587 = vpop.f32.mrb[0].mxu0
          %v588 = vadd.f32 0.0, %v587
          %v589 = vpop.f32.mrb[0].mxu0
          %590 = vmatprep.mubr.bf16.mxu0 0
          %591 = vmatmul.mubr.bf16.gmra.mrb[0].mxu0 %v469
          %v592 = vpop.f32.mrb[0].mxu0
          %v593 = vadd.f32 0.0, %v592
          %v594 = vpop.f32.mrb[0].mxu0
          %v595 = vpop.f32.mrb[0].mxu0
          %v596 = vadd.f32 0.0, %v595
          %v597 = vpop.f32.mrb[0].mxu0
          %598 = vmatprep.mubr.bf16.mxu0 0
          %599 = vmatmul.mubr.bf16.gmra.mrb[0].mxu0 %v472
          %v600 = vpop.f32.mrb[0].mxu0
          %v601 = vadd.f32 0.0, %v600
          %v602 = vpop.f32.mrb[0].mxu0
          %v603 = vpop.f32.mrb[0].mxu0
          %v604 = vadd.f32 0.0, %v603
          %v605 = vpop.f32.mrb[0].mxu0
          %606 = vmatprep.mubr.bf16.mxu0 0
          %607 = vmatmul.mubr.bf16.gmra.mrb[0].mxu0 %v475
          %v608 = vpop.f32.mrb[0].mxu0
          %v609 = vadd.f32 0.0, %v608
          %v610 = vpop.f32.mrb[0].mxu0
          %v611 = vpop.f32.mrb[0].mxu0
          %v612 = vadd.f32 0.0, %v611
          %v613 = vpop.f32.mrb[0].mxu0
          %614 = vdwg.mxu0
          %v615 = vpack.c.bf16 %v516, %v512
          %v616 = vpack.c.bf16 %v526, %v522
          %v617 = vpack.c.bf16 %v536, %v532
          %v618 = vpack.c.bf16 %v546, %v542
          %619 = vst [vmem:[#allocation2] sm:$0xff] %v615
          %620 = vst [vmem:[#allocation2 + $0x8] sm:$0xff] %v616
          %621 = vst [vmem:[#allocation2 + $0x10] sm:$0xff] %v617
          %622 = vst [vmem:[#allocation2 + $0x18] sm:$0xff] %v618
          %v623 = vpack.c.bf16 %v518, %v514
          %v624 = vpack.c.bf16 %v528, %v524
          %v625 = vpack.c.bf16 %v538, %v534
          %v626 = vpack.c.bf16 %v548, %v544
          %627 = vst [vmem:[#allocation3] sm:$0xff] %v623
          %628 = vst [vmem:[#allocation3 + $0x8] sm:$0xff] %v624
          %629 = vst [vmem:[#allocation3 + $0x10] sm:$0xff] %v625
          %630 = vst [vmem:[#allocation3 + $0x18] sm:$0xff] %v626
          %v631 = vld [vmem:[%s2] sm:$0x1]
          %v633 = vlaneseq
          %v634 = vshrl.u32 %v633, 7
          %v635 = vsub.s32 0, %v634
          %v636 = vrot.slane %v631, %v635
          %v638 = vadd.f32 %v585, %v636
          %v639 = vadd.f32 %v588, %v636
          %v640 = vadd.f32 %v593, %v636
          %v641 = vadd.f32 %v596, %v636
          %v642 = vadd.f32 %v601, %v636
          %v643 = vadd.f32 %v604, %v636
          %v644 = vadd.f32 %v609, %v636
          %v645 = vadd.f32 %v612, %v636
          %646 = vst [vmem:[#allocation4] sm:$0xff] %v638
          %647 = vst [vmem:[#allocation4 + $0x8] sm:$0xff] %v639
          %648 = vst [vmem:[#allocation4 + $0x10] sm:$0xff] %v640
          %649 = vst [vmem:[#allocation4 + $0x18] sm:$0xff] %v641
          %650 = vst [vmem:[#allocation4 + $0x20] sm:$0xff] %v642
          %651 = vst [vmem:[#allocation4 + $0x28] sm:$0xff] %v643
          %652 = vst [vmem:[#allocation4 + $0x30] sm:$0xff] %v644
          %653 = vst [vmem:[#allocation4 + $0x38] sm:$0xff] %v645
          %654 = vst [vmem:[#allocation5] sm:$0xff] 0.0
          %655 = vst [vmem:[#allocation5 + $0x8] sm:$0xff] 0.0
          %656 = vst [vmem:[#allocation5 + $0x10] sm:$0xff] 0.0
          %657 = vst [vmem:[#allocation5 + $0x18] sm:$0xff] 0.0
          %658 = vst [vmem:[#allocation5 + $0x20] sm:$0xff] 0.0
          %659 = vst [vmem:[#allocation5 + $0x28] sm:$0xff] 0.0
          %660 = vst [vmem:[#allocation5 + $0x30] sm:$0xff] 0.0
          %661 = vst [vmem:[#allocation5 + $0x38] sm:$0xff] 0.0
          %v662 = vlaneseq
          %v663 = vand.u32 %v662, 127
          %vm664 = vcmask 523264
          %665 = vst.msk [vmem:[#allocation6] sm:$0xff] %vm664, %v663
          %666 = vst.msk [vmem:[#allocation6 + $0x8] sm:$0xff] %vm664, %v663
          %667 = vst.msk [vmem:[#allocation6 + $0x10] sm:$0xff] %vm664, %v663
          %668 = vst.msk [vmem:[#allocation6 + $0x18] sm:$0xff] %vm664, %v663
          %669 = vst.msk [vmem:[#allocation6 + $0x20] sm:$0xff] %vm664, %v663
          %670 = vst.msk [vmem:[#allocation6 + $0x28] sm:$0xff] %vm664, %v663
          %671 = vst.msk [vmem:[#allocation6 + $0x30] sm:$0xff] %vm664, %v663
          %672 = vst.msk [vmem:[#allocation6 + $0x38] sm:$0xff] %vm664, %v663
          %673 = vst.msk [vmem:[#allocation6 + $0x40] sm:$0xff] %vm664, %v663
          %674 = vst.msk [vmem:[#allocation6 + $0x48] sm:$0xff] %vm664, %v663
          %675 = vst.msk [vmem:[#allocation6 + $0x50] sm:$0xff] %vm664, %v663
          %676 = vst.msk [vmem:[#allocation6 + $0x58] sm:$0xff] %vm664, %v663
          %677 = vst.msk [vmem:[#allocation6 + $0x60] sm:$0xff] %vm664, %v663
          %678 = vst.msk [vmem:[#allocation6 + $0x68] sm:$0xff] %vm664, %v663
          %679 = vst.msk [vmem:[#allocation6 + $0x70] sm:$0xff] %vm664, %v663
          %680 = vst.msk [vmem:[#allocation6 + $0x78] sm:$0xff] %vm664, %v663
          %681 = vst.msk [vmem:[#allocation6 + $0x80] sm:$0xff] %vm664, %v663
          %682 = vst.msk [vmem:[#allocation6 + $0x88] sm:$0xff] %vm664, %v663
          %683 = vst.msk [vmem:[#allocation6 + $0x90] sm:$0xff] %vm664, %v663
          %684 = vst.msk [vmem:[#allocation6 + $0x98] sm:$0xff] %vm664, %v663
          %685 = vst.msk [vmem:[#allocation6 + $0xa0] sm:$0xff] %vm664, %v663
          %686 = vst.msk [vmem:[#allocation6 + $0xa8] sm:$0xff] %vm664, %v663
          %687 = vst.msk [vmem:[#allocation6 + $0xb0] sm:$0xff] %vm664, %v663
          %688 = vst.msk [vmem:[#allocation6 + $0xb8] sm:$0xff] %vm664, %v663
          %689 = vst.msk [vmem:[#allocation6 + $0xc0] sm:$0xff] %vm664, %v663
          %690 = vst.msk [vmem:[#allocation6 + $0xc8] sm:$0xff] %vm664, %v663
          %691 = vst.msk [vmem:[#allocation6 + $0xd0] sm:$0xff] %vm664, %v663
          %692 = vst.msk [vmem:[#allocation6 + $0xd8] sm:$0xff] %vm664, %v663
          %693 = vst.msk [vmem:[#allocation6 + $0xe0] sm:$0xff] %vm664, %v663
          %694 = vst.msk [vmem:[#allocation6 + $0xe8] sm:$0xff] %vm664, %v663
          %695 = vst.msk [vmem:[#allocation6 + $0xf0] sm:$0xff] %vm664, %v663
          %696 = vst.msk [vmem:[#allocation6 + $0xf8] sm:$0xff] %vm664, %v663
          %v697 = vlaneseq
          %v698 = vshrl.u32 %v697, 7
          %v699 = vadd.s32 %v698, 8
          %v700 = vadd.s32 %v698, 16
          %v701 = vadd.s32 %v698, 24
          %v702 = vadd.s32 %v698, 32
          %v703 = vadd.s32 %v698, 40
          %v704 = vadd.s32 %v698, 48
          %v705 = vadd.s32 %v698, 56
          %706 = vst [vmem:[#allocation7] sm:$0xff] %v698
          %707 = vst [vmem:[#allocation7 + $0x8] sm:$0xff] %v698
          %708 = vst [vmem:[#allocation7 + $0x10] sm:$0xff] %v699
          %709 = vst [vmem:[#allocation7 + $0x18] sm:$0xff] %v699
          %710 = vst [vmem:[#allocation7 + $0x20] sm:$0xff] %v700
          %711 = vst [vmem:[#allocation7 + $0x28] sm:$0xff] %v700
          %712 = vst [vmem:[#allocation7 + $0x30] sm:$0xff] %v701
          %713 = vst [vmem:[#allocation7 + $0x38] sm:$0xff] %v701
          %714 = vst [vmem:[#allocation7 + $0x40] sm:$0xff] %v702
          %715 = vst [vmem:[#allocation7 + $0x48] sm:$0xff] %v702
          %716 = vst [vmem:[#allocation7 + $0x50] sm:$0xff] %v703
          %717 = vst [vmem:[#allocation7 + $0x58] sm:$0xff] %v703
          %718 = vst [vmem:[#allocation7 + $0x60] sm:$0xff] %v704
          %719 = vst [vmem:[#allocation7 + $0x68] sm:$0xff] %v704
          %720 = vst [vmem:[#allocation7 + $0x70] sm:$0xff] %v705
          %721 = vst [vmem:[#allocation7 + $0x78] sm:$0xff] %v705
        $region64: #{scene_construction_forward.1} parent=59 // pred_fallthru
          _
        %v722 = vld [vmem:[#allocation6] sm:$0xff]
        %v723 = vld [vmem:[#allocation6 + $0x8] sm:$0xff]
        %v724 = vld [vmem:[#allocation6 + $0x10] sm:$0xff]
        %v725 = vld [vmem:[#allocation6 + $0x18] sm:$0xff]
        %v726 = vld [vmem:[#allocation6 + $0x20] sm:$0xff]
        %v727 = vld [vmem:[#allocation6 + $0x28] sm:$0xff]
        %v728 = vld [vmem:[#allocation6 + $0x30] sm:$0xff]
        %v729 = vld [vmem:[#allocation6 + $0x38] sm:$0xff]
        %v730 = vld [vmem:[#allocation6 + $0x40] sm:$0xff]
        %v731 = vld [vmem:[#allocation6 + $0x48] sm:$0xff]
        %v732 = vld [vmem:[#allocation6 + $0x50] sm:$0xff]
        %v733 = vld [vmem:[#allocation6 + $0x58] sm:$0xff]
        %v734 = vld [vmem:[#allocation6 + $0x60] sm:$0xff]
        %v735 = vld [vmem:[#allocation6 + $0x68] sm:$0xff]
        %v736 = vld [vmem:[#allocation6 + $0x70] sm:$0xff]
        %v737 = vld [vmem:[#allocation6 + $0x78] sm:$0xff]
        %v738 = vld [vmem:[#allocation6 + $0x80] sm:$0xff]
        %v739 = vld [vmem:[#allocation6 + $0x88] sm:$0xff]
        %v740 = vld [vmem:[#allocation6 + $0x90] sm:$0xff]
        %v741 = vld [vmem:[#allocation6 + $0x98] sm:$0xff]
        %v742 = vld [vmem:[#allocation6 + $0xa0] sm:$0xff]
        %v743 = vld [vmem:[#allocation6 + $0xa8] sm:$0xff]
        %v744 = vld [vmem:[#allocation6 + $0xb0] sm:$0xff]
        %v745 = vld [vmem:[#allocation6 + $0xb8] sm:$0xff]
        %v746 = vld [vmem:[#allocation6 + $0xc0] sm:$0xff]
        %v747 = vld [vmem:[#allocation6 + $0xc8] sm:$0xff]
        %v748 = vld [vmem:[#allocation6 + $0xd0] sm:$0xff]
        %v749 = vld [vmem:[#allocation6 + $0xd8] sm:$0xff]
        %v750 = vld [vmem:[#allocation6 + $0xe0] sm:$0xff]
        %v751 = vld [vmem:[#allocation6 + $0xe8] sm:$0xff]
        %v752 = vld [vmem:[#allocation6 + $0xf0] sm:$0xff]
        %v753 = vld [vmem:[#allocation6 + $0xf8] sm:$0xff]
        %v754 = vld [vmem:[%s392] sm:$0xff]
        %v755 = vld [vmem:[%s392 + $0x8] sm:$0xff]
        %v756 = vld [vmem:[%s392 + $0x10] sm:$0xff]
        %v757 = vld [vmem:[%s392 + $0x18] sm:$0xff]
        %v758 = vld [vmem:[%s392 + $0x20] sm:$0xff]
        %v759 = vld [vmem:[%s392 + $0x28] sm:$0xff]
        %v760 = vld [vmem:[%s392 + $0x30] sm:$0xff]
        %v761 = vld [vmem:[%s392 + $0x38] sm:$0xff]
        %v762 = vld [vmem:[%s392 + $0x40] sm:$0xff]
        %v763 = vld [vmem:[%s392 + $0x48] sm:$0xff]
        %v764 = vld [vmem:[%s392 + $0x50] sm:$0xff]
        %v765 = vld [vmem:[%s392 + $0x58] sm:$0xff]
        %v766 = vld [vmem:[%s392 + $0x60] sm:$0xff]
        %v767 = vld [vmem:[%s392 + $0x68] sm:$0xff]
        %v768 = vld [vmem:[%s392 + $0x70] sm:$0xff]
        %v769 = vld [vmem:[%s392 + $0x78] sm:$0xff]
        %v770 = vld [vmem:[%s392 + $0x80] sm:$0xff]
        %v771 = vld [vmem:[%s392 + $0x88] sm:$0xff]
        %v772 = vld [vmem:[%s392 + $0x90] sm:$0xff]
        %v773 = vld [vmem:[%s392 + $0x98] sm:$0xff]
        %v774 = vld [vmem:[%s392 + $0xa0] sm:$0xff]
        %v775 = vld [vmem:[%s392 + $0xa8] sm:$0xff]
        %v776 = vld [vmem:[%s392 + $0xb0] sm:$0xff]
        %v777 = vld [vmem:[%s392 + $0xb8] sm:$0xff]
        %v778 = vld [vmem:[%s392 + $0xc0] sm:$0xff]
        %v779 = vld [vmem:[%s392 + $0xc8] sm:$0xff]
        %v780 = vld [vmem:[%s392 + $0xd0] sm:$0xff]
        %v781 = vld [vmem:[%s392 + $0xd8] sm:$0xff]
        %v782 = vld [vmem:[%s392 + $0xe0] sm:$0xff]
        %v783 = vld [vmem:[%s392 + $0xe8] sm:$0xff]
        %v784 = vld [vmem:[%s392 + $0xf0] sm:$0xff]
        %v785 = vld [vmem:[%s392 + $0xf8] sm:$0xff]
        %786 = vset.pattern.permute.xlu0 0
        %787 = vperm.xlu0 %786, %v754
        %v788 = vpop.permute.xlu0 %787
        %789 = vset.pattern.permute.xlu0 0
        %790 = vperm.xlu0 %789, %v755
        %v791 = vpop.permute.xlu0 %790
        %792 = vset.pattern.permute.xlu0 0
        %793 = vperm.xlu0 %792, %v756
        %v794 = vpop.permute.xlu0 %793
        %795 = vset.pattern.permute.xlu0 0
        %796 = vperm.xlu0 %795, %v757
        %v797 = vpop.permute.xlu0 %796
        %798 = vset.pattern.permute.xlu0 0
        %799 = vperm.xlu0 %798, %v758
        %v800 = vpop.permute.xlu0 %799
        %801 = vset.pattern.permute.xlu0 0
        %802 = vperm.xlu0 %801, %v759
        %v803 = vpop.permute.xlu0 %802
        %804 = vset.pattern.permute.xlu0 0
        %805 = vperm.xlu0 %804, %v760
        %v806 = vpop.permute.xlu0 %805
        %807 = vset.pattern.permute.xlu0 0
        %808 = vperm.xlu0 %807, %v761
        %v809 = vpop.permute.xlu0 %808
        %810 = vset.pattern.permute.xlu0 0
        %811 = vperm.xlu0 %810, %v762
        %v812 = vpop.permute.xlu0 %811
        %813 = vset.pattern.permute.xlu0 0
        %814 = vperm.xlu0 %813, %v763
        %v815 = vpop.permute.xlu0 %814
        %816 = vset.pattern.permute.xlu0 0
        %817 = vperm.xlu0 %816, %v764
        %v818 = vpop.permute.xlu0 %817
        %819 = vset.pattern.permute.xlu0 0
        %820 = vperm.xlu0 %819, %v765
        %v821 = vpop.permute.xlu0 %820
        %822 = vset.pattern.permute.xlu0 0
        %823 = vperm.xlu0 %822, %v766
        %v824 = vpop.permute.xlu0 %823
        %825 = vset.pattern.permute.xlu0 0
        %826 = vperm.xlu0 %825, %v767
        %v827 = vpop.permute.xlu0 %826
        %828 = vset.pattern.permute.xlu0 0
        %829 = vperm.xlu0 %828, %v768
        %v830 = vpop.permute.xlu0 %829
        %831 = vset.pattern.permute.xlu0 0
        %832 = vperm.xlu0 %831, %v769
        %v833 = vpop.permute.xlu0 %832
        %834 = vset.pattern.permute.xlu0 0
        %835 = vperm.xlu0 %834, %v770
        %v836 = vpop.permute.xlu0 %835
        %837 = vset.pattern.permute.xlu0 0
        %838 = vperm.xlu0 %837, %v771
        %v839 = vpop.permute.xlu0 %838
        %840 = vset.pattern.permute.xlu0 0
        %841 = vperm.xlu0 %840, %v772
        %v842 = vpop.permute.xlu0 %841
        %843 = vset.pattern.permute.xlu0 0
        %844 = vperm.xlu0 %843, %v773
        %v845 = vpop.permute.xlu0 %844
        %846 = vset.pattern.permute.xlu0 0
        %847 = vperm.xlu0 %846, %v774
        %v848 = vpop.permute.xlu0 %847
        %849 = vset.pattern.permute.xlu0 0
        %850 = vperm.xlu0 %849, %v775
        %v851 = vpop.permute.xlu0 %850
        %852 = vset.pattern.permute.xlu0 0
        %853 = vperm.xlu0 %852, %v776
        %v854 = vpop.permute.xlu0 %853
        %855 = vset.pattern.permute.xlu0 0
        %856 = vperm.xlu0 %855, %v777
        %v857 = vpop.permute.xlu0 %856
        %858 = vset.pattern.permute.xlu0 0
        %859 = vperm.xlu0 %858, %v778
        %v860 = vpop.permute.xlu0 %859
        %861 = vset.pattern.permute.xlu0 0
        %862 = vperm.xlu0 %861, %v779
        %v863 = vpop.permute.xlu0 %862
        %864 = vset.pattern.permute.xlu0 0
        %865 = vperm.xlu0 %864, %v780
        %v866 = vpop.permute.xlu0 %865
        %867 = vset.pattern.permute.xlu0 0
        %868 = vperm.xlu0 %867, %v781
        %v869 = vpop.permute.xlu0 %868
        %870 = vset.pattern.permute.xlu0 0
        %871 = vperm.xlu0 %870, %v782
        %v872 = vpop.permute.xlu0 %871
        %873 = vset.pattern.permute.xlu0 0
        %874 = vperm.xlu0 %873, %v783
        %v875 = vpop.permute.xlu0 %874
        %876 = vset.pattern.permute.xlu0 0
        %877 = vperm.xlu0 %876, %v784
        %v878 = vpop.permute.xlu0 %877
        %879 = vset.pattern.permute.xlu0 0
        %880 = vperm.xlu0 %879, %v785
        %v881 = vpop.permute.xlu0 %880
        %vm882 = vcmp.eq.s32.totalorder %v722, %v788
        %vm883 = vcmp.eq.s32.totalorder %v723, %v791
        %vm884 = vcmp.eq.s32.totalorder %v724, %v794
        %vm885 = vcmp.eq.s32.totalorder %v725, %v797
        %vm886 = vcmp.eq.s32.totalorder %v726, %v800
        %vm887 = vcmp.eq.s32.totalorder %v727, %v803
        %vm888 = vcmp.eq.s32.totalorder %v728, %v806
        %vm889 = vcmp.eq.s32.totalorder %v729, %v809
        %vm890 = vcmp.eq.s32.totalorder %v730, %v812
        %vm891 = vcmp.eq.s32.totalorder %v731, %v815
        %vm892 = vcmp.eq.s32.totalorder %v732, %v818
        %vm893 = vcmp.eq.s32.totalorder %v733, %v821
        %vm894 = vcmp.eq.s32.totalorder %v734, %v824
        %vm895 = vcmp.eq.s32.totalorder %v735, %v827
        %vm896 = vcmp.eq.s32.totalorder %v736, %v830
        %vm897 = vcmp.eq.s32.totalorder %v737, %v833
        %vm898 = vcmp.eq.s32.totalorder %v738, %v836
        %vm899 = vcmp.eq.s32.totalorder %v739, %v839
        %vm900 = vcmp.eq.s32.totalorder %v740, %v842
        %vm901 = vcmp.eq.s32.totalorder %v741, %v845
        %vm902 = vcmp.eq.s32.totalorder %v742, %v848
        %vm903 = vcmp.eq.s32.totalorder %v743, %v851
        %vm904 = vcmp.eq.s32.totalorder %v744, %v854
        %vm905 = vcmp.eq.s32.totalorder %v745, %v857
        %vm906 = vcmp.eq.s32.totalorder %v746, %v860
        %vm907 = vcmp.eq.s32.totalorder %v747, %v863
        %vm908 = vcmp.eq.s32.totalorder %v748, %v866
        %vm909 = vcmp.eq.s32.totalorder %v749, %v869
        %vm910 = vcmp.eq.s32.totalorder %v750, %v872
        %vm911 = vcmp.eq.s32.totalorder %v751, %v875
        %vm912 = vcmp.eq.s32.totalorder %v752, %v878
        %vm913 = vcmp.eq.s32.totalorder %v753, %v881
        %v914 = vsel %vm882, 1, 0
        %v915 = vsel %vm883, 1, 0
        %v916 = vsel %vm884, 1, 0
        %v917 = vsel %vm885, 1, 0
        %v918 = vsel %vm886, 1, 0
        %v919 = vsel %vm887, 1, 0
        %v920 = vsel %vm888, 1, 0
        %v921 = vsel %vm889, 1, 0
        %v922 = vsel %vm890, 1, 0
        %v923 = vsel %vm891, 1, 0
        %v924 = vsel %vm892, 1, 0
        %v925 = vsel %vm893, 1, 0
        %v926 = vsel %vm894, 1, 0
        %v927 = vsel %vm895, 1, 0
        %v928 = vsel %vm896, 1, 0
        %v929 = vsel %vm897, 1, 0
        %v930 = vsel %vm898, 1, 0
        %v931 = vsel %vm899, 1, 0
        %v932 = vsel %vm900, 1, 0
        %v933 = vsel %vm901, 1, 0
        %v934 = vsel %vm902, 1, 0
        %v935 = vsel %vm903, 1, 0
        %v936 = vsel %vm904, 1, 0
        %v937 = vsel %vm905, 1, 0
        %v938 = vsel %vm906, 1, 0
        %v939 = vsel %vm907, 1, 0
        %v940 = vsel %vm908, 1, 0
        %v941 = vsel %vm909, 1, 0
        %v942 = vsel %vm910, 1, 0
        %v943 = vsel %vm911, 1, 0
        %v944 = vsel %vm912, 1, 0
        %v945 = vsel %vm913, 1, 0
        %v946 = vcvt.s32.f32 %v914
        %v947 = vcvt.s32.f32 %v915
        %v948 = vcvt.s32.f32 %v916
        %v949 = vcvt.s32.f32 %v917
        %v950 = vcvt.s32.f32 %v918
        %v951 = vcvt.s32.f32 %v919
        %v952 = vcvt.s32.f32 %v920
        %v953 = vcvt.s32.f32 %v921
        %v954 = vcvt.s32.f32 %v922
        %v955 = vcvt.s32.f32 %v923
        %v956 = vcvt.s32.f32 %v924
        %v957 = vcvt.s32.f32 %v925
        %v958 = vcvt.s32.f32 %v926
        %v959 = vcvt.s32.f32 %v927
        %v960 = vcvt.s32.f32 %v928
        %v961 = vcvt.s32.f32 %v929
        %v962 = vcvt.s32.f32 %v930
        %v963 = vcvt.s32.f32 %v931
        %v964 = vcvt.s32.f32 %v932
        %v965 = vcvt.s32.f32 %v933
        %v966 = vcvt.s32.f32 %v934
        %v967 = vcvt.s32.f32 %v935
        %v968 = vcvt.s32.f32 %v936
        %v969 = vcvt.s32.f32 %v937
        %v970 = vcvt.s32.f32 %v938
        %v971 = vcvt.s32.f32 %v939
        %v972 = vcvt.s32.f32 %v940
        %v973 = vcvt.s32.f32 %v941
        %v974 = vcvt.s32.f32 %v942
        %v975 = vcvt.s32.f32 %v943
        %v976 = vcvt.s32.f32 %v944
        %v977 = vcvt.s32.f32 %v945
        %v978 = vpack.c.bf16 %v947, %v946
        %v979 = vpack.c.bf16 %v949, %v948
        %v980 = vpack.c.bf16 %v951, %v950
        %v981 = vpack.c.bf16 %v953, %v952
        %v982 = vpack.c.bf16 %v955, %v954
        %v983 = vpack.c.bf16 %v957, %v956
        %v984 = vpack.c.bf16 %v959, %v958
        %v985 = vpack.c.bf16 %v961, %v960
        %v986 = vpack.c.bf16 %v963, %v962
        %v987 = vpack.c.bf16 %v965, %v964
        %v988 = vpack.c.bf16 %v967, %v966
        %v989 = vpack.c.bf16 %v969, %v968
        %v990 = vpack.c.bf16 %v971, %v970
        %v991 = vpack.c.bf16 %v973, %v972
        %v992 = vpack.c.bf16 %v975, %v974
        %v993 = vpack.c.bf16 %v977, %v976
        %v994 = vld [vmem:[%s398] sm:$0xff]
        %v995 = vld [vmem:[%s398 + $0x8] sm:$0xff]
        %v996 = vld [vmem:[%s398 + $0x10] sm:$0xff]
        %v997 = vld [vmem:[%s398 + $0x18] sm:$0xff]
        %v998 = vld [vmem:[%s398 + $0x20] sm:$0xff]
        %v999 = vld [vmem:[%s398 + $0x28] sm:$0xff]
        %v1000 = vld [vmem:[%s398 + $0x30] sm:$0xff]
        %v1001 = vld [vmem:[%s398 + $0x38] sm:$0xff]
        %v1002 = vld [vmem:[%s398 + $0x40] sm:$0xff]
        %v1003 = vld [vmem:[%s398 + $0x48] sm:$0xff]
        %v1004 = vld [vmem:[%s398 + $0x50] sm:$0xff]
        %v1005 = vld [vmem:[%s398 + $0x58] sm:$0xff]
        %v1006 = vld [vmem:[%s398 + $0x60] sm:$0xff]
        %v1007 = vld [vmem:[%s398 + $0x68] sm:$0xff]
        %v1008 = vld [vmem:[%s398 + $0x70] sm:$0xff]
        %v1009 = vld [vmem:[%s398 + $0x78] sm:$0xff]
        %v1010 = vld [vmem:[%s398 + $0x80] sm:$0xff]
        %v1011 = vld [vmem:[%s398 + $0x88] sm:$0xff]
        %v1012 = vld [vmem:[%s398 + $0x90] sm:$0xff]
        %v1013 = vld [vmem:[%s398 + $0x98] sm:$0xff]
        %v1014 = vld [vmem:[%s398 + $0xa0] sm:$0xff]
        %v1015 = vld [vmem:[%s398 + $0xa8] sm:$0xff]
        %v1016 = vld [vmem:[%s398 + $0xb0] sm:$0xff]
        %v1017 = vld [vmem:[%s398 + $0xb8] sm:$0xff]
        %v1018 = vld [vmem:[%s398 + $0xc0] sm:$0xff]
        %v1019 = vld [vmem:[%s398 + $0xc8] sm:$0xff]
        %v1020 = vld [vmem:[%s398 + $0xd0] sm:$0xff]
        %v1021 = vld [vmem:[%s398 + $0xd8] sm:$0xff]
        %v1022 = vld [vmem:[%s398 + $0xe0] sm:$0xff]
        %v1023 = vld [vmem:[%s398 + $0xe8] sm:$0xff]
        %v1024 = vld [vmem:[%s398 + $0xf0] sm:$0xff]
        %v1025 = vld [vmem:[%s398 + $0xf8] sm:$0xff]
        %1026 = vset.pattern.permute.xlu0 0
        %1027 = vperm.xlu0 %1026, %v994
        %v1028 = vpop.permute.xlu0 %1027
        %1029 = vset.pattern.permute.xlu0 0
        %1030 = vperm.xlu0 %1029, %v995
        %v1031 = vpop.permute.xlu0 %1030
        %1032 = vset.pattern.permute.xlu0 0
        %1033 = vperm.xlu0 %1032, %v996
        %v1034 = vpop.permute.xlu0 %1033
        %1035 = vset.pattern.permute.xlu0 0
        %1036 = vperm.xlu0 %1035, %v997
        %v1037 = vpop.permute.xlu0 %1036
        %1038 = vset.pattern.permute.xlu0 0
        %1039 = vperm.xlu0 %1038, %v998
        %v1040 = vpop.permute.xlu0 %1039
        %1041 = vset.pattern.permute.xlu0 0
        %1042 = vperm.xlu0 %1041, %v999
        %v1043 = vpop.permute.xlu0 %1042
        %1044 = vset.pattern.permute.xlu0 0
        %1045 = vperm.xlu0 %1044, %v1000
        %v1046 = vpop.permute.xlu0 %1045
        %1047 = vset.pattern.permute.xlu0 0
        %1048 = vperm.xlu0 %1047, %v1001
        %v1049 = vpop.permute.xlu0 %1048
        %1050 = vset.pattern.permute.xlu0 0
        %1051 = vperm.xlu0 %1050, %v1002
        %v1052 = vpop.permute.xlu0 %1051
        %1053 = vset.pattern.permute.xlu0 0
        %1054 = vperm.xlu0 %1053, %v1003
        %v1055 = vpop.permute.xlu0 %1054
        %1056 = vset.pattern.permute.xlu0 0
        %1057 = vperm.xlu0 %1056, %v1004
        %v1058 = vpop.permute.xlu0 %1057
        %1059 = vset.pattern.permute.xlu0 0
        %1060 = vperm.xlu0 %1059, %v1005
        %v1061 = vpop.permute.xlu0 %1060
        %1062 = vset.pattern.permute.xlu0 0
        %1063 = vperm.xlu0 %1062, %v1006
        %v1064 = vpop.permute.xlu0 %1063
        %1065 = vset.pattern.permute.xlu0 0
        %1066 = vperm.xlu0 %1065, %v1007
        %v1067 = vpop.permute.xlu0 %1066
        %1068 = vset.pattern.permute.xlu0 0
        %1069 = vperm.xlu0 %1068, %v1008
        %v1070 = vpop.permute.xlu0 %1069
        %1071 = vset.pattern.permute.xlu0 0
        %1072 = vperm.xlu0 %1071, %v1009
        %v1073 = vpop.permute.xlu0 %1072
        %1074 = vset.pattern.permute.xlu0 0
        %1075 = vperm.xlu0 %1074, %v1010
        %v1076 = vpop.permute.xlu0 %1075
        %1077 = vset.pattern.permute.xlu0 0
        %1078 = vperm.xlu0 %1077, %v1011
        %v1079 = vpop.permute.xlu0 %1078
        %1080 = vset.pattern.permute.xlu0 0
        %1081 = vperm.xlu0 %1080, %v1012
        %v1082 = vpop.permute.xlu0 %1081
        %1083 = vset.pattern.permute.xlu0 0
        %1084 = vperm.xlu0 %1083, %v1013
        %v1085 = vpop.permute.xlu0 %1084
        %1086 = vset.pattern.permute.xlu0 0
        %1087 = vperm.xlu0 %1086, %v1014
        %v1088 = vpop.permute.xlu0 %1087
        %1089 = vset.pattern.permute.xlu0 0
        %1090 = vperm.xlu0 %1089, %v1015
        %v1091 = vpop.permute.xlu0 %1090
        %1092 = vset.pattern.permute.xlu0 0
        %1093 = vperm.xlu0 %1092, %v1016
        %v1094 = vpop.permute.xlu0 %1093
        %1095 = vset.pattern.permute.xlu0 0
        %1096 = vperm.xlu0 %1095, %v1017
        %v1097 = vpop.permute.xlu0 %1096
        %1098 = vset.pattern.permute.xlu0 0
        %1099 = vperm.xlu0 %1098, %v1018
        %v1100 = vpop.permute.xlu0 %1099
        %1101 = vset.pattern.permute.xlu0 0
        %1102 = vperm.xlu0 %1101, %v1019
        %v1103 = vpop.permute.xlu0 %1102
        %1104 = vset.pattern.permute.xlu0 0
        %1105 = vperm.xlu0 %1104, %v1020
        %v1106 = vpop.permute.xlu0 %1105
        %1107 = vset.pattern.permute.xlu0 0
        %1108 = vperm.xlu0 %1107, %v1021
        %v1109 = vpop.permute.xlu0 %1108
        %1110 = vset.pattern.permute.xlu0 0
        %1111 = vperm.xlu0 %1110, %v1022
        %v1112 = vpop.permute.xlu0 %1111
        %1113 = vset.pattern.permute.xlu0 0
        %1114 = vperm.xlu0 %1113, %v1023
        %v1115 = vpop.permute.xlu0 %1114
        %1116 = vset.pattern.permute.xlu0 0
        %1117 = vperm.xlu0 %1116, %v1024
        %v1118 = vpop.permute.xlu0 %1117
        %1119 = vset.pattern.permute.xlu0 0
        %1120 = vperm.xlu0 %1119, %v1025
        %v1121 = vpop.permute.xlu0 %1120
        %vm1122 = vcmp.eq.s32.totalorder %v722, %v1028
        %vm1123 = vcmp.eq.s32.totalorder %v723, %v1031
        %vm1124 = vcmp.eq.s32.totalorder %v724, %v1034
        %vm1125 = vcmp.eq.s32.totalorder %v725, %v1037
        %vm1126 = vcmp.eq.s32.totalorder %v726, %v1040
        %vm1127 = vcmp.eq.s32.totalorder %v727, %v1043
        %vm1128 = vcmp.eq.s32.totalorder %v728, %v1046
        %vm1129 = vcmp.eq.s32.totalorder %v729, %v1049
        %vm1130 = vcmp.eq.s32.totalorder %v730, %v1052
        %vm1131 = vcmp.eq.s32.totalorder %v731, %v1055
        %vm1132 = vcmp.eq.s32.totalorder %v732, %v1058
        %vm1133 = vcmp.eq.s32.totalorder %v733, %v1061
        %vm1134 = vcmp.eq.s32.totalorder %v734, %v1064
        %vm1135 = vcmp.eq.s32.totalorder %v735, %v1067
        %vm1136 = vcmp.eq.s32.totalorder %v736, %v1070
        %vm1137 = vcmp.eq.s32.totalorder %v737, %v1073
        %vm1138 = vcmp.eq.s32.totalorder %v738, %v1076
        %vm1139 = vcmp.eq.s32.totalorder %v739, %v1079
        %vm1140 = vcmp.eq.s32.totalorder %v740, %v1082
        %vm1141 = vcmp.eq.s32.totalorder %v741, %v1085
        %vm1142 = vcmp.eq.s32.totalorder %v742, %v1088
        %vm1143 = vcmp.eq.s32.totalorder %v743, %v1091
        %vm1144 = vcmp.eq.s32.totalorder %v744, %v1094
        %vm1145 = vcmp.eq.s32.totalorder %v745, %v1097
        %vm1146 = vcmp.eq.s32.totalorder %v746, %v1100
        %vm1147 = vcmp.eq.s32.totalorder %v747, %v1103
        %vm1148 = vcmp.eq.s32.totalorder %v748, %v1106
        %vm1149 = vcmp.eq.s32.totalorder %v749, %v1109
        %vm1150 = vcmp.eq.s32.totalorder %v750, %v1112
        %vm1151 = vcmp.eq.s32.totalorder %v751, %v1115
        %vm1152 = vcmp.eq.s32.totalorder %v752, %v1118
        %vm1153 = vcmp.eq.s32.totalorder %v753, %v1121
        %v1154 = vsel %vm1122, 1, 0
        %v1155 = vsel %vm1123, 1, 0
        %v1156 = vsel %vm1124, 1, 0
        %v1157 = vsel %vm1125, 1, 0
        %v1158 = vsel %vm1126, 1, 0
        %v1159 = vsel %vm1127, 1, 0
        %v1160 = vsel %vm1128, 1, 0
        %v1161 = vsel %vm1129, 1, 0
        %v1162 = vsel %vm1130, 1, 0
        %v1163 = vsel %vm1131, 1, 0
        %v1164 = vsel %vm1132, 1, 0
        %v1165 = vsel %vm1133, 1, 0
        %v1166 = vsel %vm1134, 1, 0
        %v1167 = vsel %vm1135, 1, 0
        %v1168 = vsel %vm1136, 1, 0
        %v1169 = vsel %vm1137, 1, 0
        %v1170 = vsel %vm1138, 1, 0
        %v1171 = vsel %vm1139, 1, 0
        %v1172 = vsel %vm1140, 1, 0
        %v1173 = vsel %vm1141, 1, 0
        %v1174 = vsel %vm1142, 1, 0
        %v1175 = vsel %vm1143, 1, 0
        %v1176 = vsel %vm1144, 1, 0
        %v1177 = vsel %vm1145, 1, 0
        %v1178 = vsel %vm1146, 1, 0
        %v1179 = vsel %vm1147, 1, 0
        %v1180 = vsel %vm1148, 1, 0
        %v1181 = vsel %vm1149, 1, 0
        %v1182 = vsel %vm1150, 1, 0
        %v1183 = vsel %vm1151, 1, 0
        %v1184 = vsel %vm1152, 1, 0
        %v1185 = vsel %vm1153, 1, 0
        %v1186 = vcvt.s32.f32 %v1154
        %v1187 = vcvt.s32.f32 %v1155
        %v1188 = vcvt.s32.f32 %v1156
        %v1189 = vcvt.s32.f32 %v1157
        %v1190 = vcvt.s32.f32 %v1158
        %v1191 = vcvt.s32.f32 %v1159
        %v1192 = vcvt.s32.f32 %v1160
        %v1193 = vcvt.s32.f32 %v1161
        %v1194 = vcvt.s32.f32 %v1162
        %v1195 = vcvt.s32.f32 %v1163
        %v1196 = vcvt.s32.f32 %v1164
        %v1197 = vcvt.s32.f32 %v1165
        %v1198 = vcvt.s32.f32 %v1166
        %v1199 = vcvt.s32.f32 %v1167
        %v1200 = vcvt.s32.f32 %v1168
        %v1201 = vcvt.s32.f32 %v1169
        %v1202 = vcvt.s32.f32 %v1170
        %v1203 = vcvt.s32.f32 %v1171
        %v1204 = vcvt.s32.f32 %v1172
        %v1205 = vcvt.s32.f32 %v1173
        %v1206 = vcvt.s32.f32 %v1174
        %v1207 = vcvt.s32.f32 %v1175
        %v1208 = vcvt.s32.f32 %v1176
        %v1209 = vcvt.s32.f32 %v1177
        %v1210 = vcvt.s32.f32 %v1178
        %v1211 = vcvt.s32.f32 %v1179
        %v1212 = vcvt.s32.f32 %v1180
        %v1213 = vcvt.s32.f32 %v1181
        %v1214 = vcvt.s32.f32 %v1182
        %v1215 = vcvt.s32.f32 %v1183
        %v1216 = vcvt.s32.f32 %v1184
        %v1217 = vcvt.s32.f32 %v1185
        %v1218 = vpack.c.bf16 %v1187, %v1186
        %v1219 = vpack.c.bf16 %v1189, %v1188
        %v1220 = vpack.c.bf16 %v1191, %v1190
        %v1221 = vpack.c.bf16 %v1193, %v1192
        %v1222 = vpack.c.bf16 %v1195, %v1194
        %v1223 = vpack.c.bf16 %v1197, %v1196
        %v1224 = vpack.c.bf16 %v1199, %v1198
        %v1225 = vpack.c.bf16 %v1201, %v1200
        %v1226 = vpack.c.bf16 %v1203, %v1202
        %v1227 = vpack.c.bf16 %v1205, %v1204
        %v1228 = vpack.c.bf16 %v1207, %v1206
        %v1229 = vpack.c.bf16 %v1209, %v1208
        %v1230 = vpack.c.bf16 %v1211, %v1210
        %v1231 = vpack.c.bf16 %v1213, %v1212
        %v1232 = vpack.c.bf16 %v1215, %v1214
        %v1233 = vpack.c.bf16 %v1217, %v1216
        %v1234 = vld [vmem:[#allocation2] sm:$0xff]
        %v1235 = vld [vmem:[#allocation2 + $0x8] sm:$0xff]
        %v1236 = vld [vmem:[#allocation2 + $0x10] sm:$0xff]
        %v1237 = vld [vmem:[#allocation2 + $0x18] sm:$0xff]
        %v1238 = vld [vmem:[#allocation3] sm:$0xff]
        %v1239 = vld [vmem:[#allocation3 + $0x8] sm:$0xff]
        %v1240 = vld [vmem:[#allocation3 + $0x10] sm:$0xff]
        %v1241 = vld [vmem:[#allocation3 + $0x18] sm:$0xff]
        %vm1242 = vcmask 523264
        %v1244 = vsel %vm1242, %v1218, 0
        %v1247 = vsel %vm1242, %v1219, 0
        %v1250 = vsel %vm1242, %v1220, 0
        %v1253 = vsel %vm1242, %v1221, 0
        %v1256 = vsel %vm1242, %v1222, 0
        %v1259 = vsel %vm1242, %v1223, 0
        %v1262 = vsel %vm1242, %v1224, 0
        %v1265 = vsel %vm1242, %v1225, 0
        %v1268 = vsel %vm1242, %v1226, 0
        %v1271 = vsel %vm1242, %v1227, 0
        %v1274 = vsel %vm1242, %v1228, 0
        %v1277 = vsel %vm1242, %v1229, 0
        %v1280 = vsel %vm1242, %v1230, 0
        %v1283 = vsel %vm1242, %v1231, 0
        %v1286 = vsel %vm1242, %v1232, 0
        %v1289 = vsel %vm1242, %v1233, 0
        %1291 = vmatprep.subr.bf16.mxu0 0
        %1292 = vmatpush1.bf16.msra.mxu0 %v1238
        %1293 = vmatprep.subr.bf16.mxu0 0
        %1294 = vmatpush1.bf16.msra.mxu0 %v1239
        %1295 = vmatprep.subr.bf16.mxu0 0
        %1296 = vmatpush1.bf16.msra.mxu0 %v1240
        %1297 = vmatprep.subr.bf16.mxu0 0
        %1298 = vmatpush1.bf16.msra.mxu0 %v1241
        %1299 = vmatprep.subr.bf16.mxu0 0
        %1300 = vmatpush1.bf16.msra.mxu0 0
        %1301 = vmatprep.subr.bf16.mxu0 0
        %1302 = vmatpush1.bf16.msra.mxu0 0
        %1303 = vmatprep.subr.bf16.mxu0 0
        %1304 = vmatpush1.bf16.msra.mxu0 0
        %1305 = vmatprep.subr.bf16.mxu0 0
        %1306 = vmatpush1.bf16.msra.mxu0 0
        %1307 = vmatprep.subr.bf16.mxu0 0
        %1308 = vmatpush1.bf16.msra.mxu0 0
        %1309 = vmatprep.subr.bf16.mxu0 0
        %1310 = vmatpush1.bf16.msra.mxu0 0
        %1311 = vmatprep.subr.bf16.mxu0 0
        %1312 = vmatpush1.bf16.msra.mxu0 0
        %1313 = vmatprep.subr.bf16.mxu0 0
        %1314 = vmatpush1.bf16.msra.mxu0 0
        %1315 = vmatprep.subr.bf16.mxu0 0
        %1316 = vmatpush1.bf16.msra.mxu0 0
        %1317 = vmatprep.subr.bf16.mxu0 0
        %1318 = vmatpush1.bf16.msra.mxu0 0
        %1319 = vmatprep.subr.bf16.mxu0 0
        %1320 = vmatpush1.bf16.msra.mxu0 0
        %1321 = vmatprep.subr.bf16.mxu0 0
        %1322 = vmatpush1.bf16.msra.mxu0 0
        %1323 = vmatprep.mubr.bf16.mxu0 0
        %1324 = vmatmul.mubr.bf16.gmra.mrb[0].mxu0 %v1244
        %v1325 = vpop.f32.mrb[0].mxu0
        %v1326 = vadd.f32 0.0, %v1325
        %v1327 = vpop.f32.mrb[0].mxu0
        %v1328 = vpop.f32.mrb[0].mxu0
        %v1329 = vadd.f32 0.0, %v1328
        %v1330 = vpop.f32.mrb[0].mxu0
        %1331 = vmatprep.mubr.bf16.mxu0 0
        %1332 = vmatmul.mubr.bf16.gmra.mrb[0].mxu0 %v1247
        %v1333 = vpop.f32.mrb[0].mxu0
        %v1334 = vadd.f32 0.0, %v1333
        %v1335 = vpop.f32.mrb[0].mxu0
        %v1336 = vpop.f32.mrb[0].mxu0
        %v1337 = vadd.f32 0.0, %v1336
        %v1338 = vpop.f32.mrb[0].mxu0
        %1339 = vmatprep.mubr.bf16.mxu0 0
        %1340 = vmatmul.mubr.bf16.gmra.mrb[0].mxu0 %v1250
        %v1341 = vpop.f32.mrb[0].mxu0
        %v1342 = vadd.f32 0.0, %v1341
        %v1343 = vpop.f32.mrb[0].mxu0
        %v1344 = vpop.f32.mrb[0].mxu0
        %v1345 = vadd.f32 0.0, %v1344
        %v1346 = vpop.f32.mrb[0].mxu0
        %1347 = vmatprep.mubr.bf16.mxu0 0
        %1348 = vmatmul.mubr.bf16.gmra.mrb[0].mxu0 %v1253
        %v1349 = vpop.f32.mrb[0].mxu0
        %v1350 = vadd.f32 0.0, %v1349
        %v1351 = vpop.f32.mrb[0].mxu0
        %v1352 = vpop.f32.mrb[0].mxu0
        %v1353 = vadd.f32 0.0, %v1352
        %v1354 = vpop.f32.mrb[0].mxu0
        %1355 = vmatprep.mubr.bf16.mxu0 0
        %1356 = vmatmul.mubr.bf16.gmra.mrb[0].mxu0 %v1256
        %v1357 = vpop.f32.mrb[0].mxu0
        %v1358 = vadd.f32 0.0, %v1357
        %v1359 = vpop.f32.mrb[0].mxu0
        %v1360 = vpop.f32.mrb[0].mxu0
        %v1361 = vadd.f32 0.0, %v1360
        %v1362 = vpop.f32.mrb[0].mxu0
        %1363 = vmatprep.mubr.bf16.mxu0 0
        %1364 = vmatmul.mubr.bf16.gmra.mrb[0].mxu0 %v1259
        %v1365 = vpop.f32.mrb[0].mxu0
        %v1366 = vadd.f32 0.0, %v1365
        %v1367 = vpop.f32.mrb[0].mxu0
        %v1368 = vpop.f32.mrb[0].mxu0
        %v1369 = vadd.f32 0.0, %v1368
        %v1370 = vpop.f32.mrb[0].mxu0
        %1371 = vmatprep.mubr.bf16.mxu0 0
        %1372 = vmatmul.mubr.bf16.gmra.mrb[0].mxu0 %v1262
        %v1373 = vpop.f32.mrb[0].mxu0
        %v1374 = vadd.f32 0.0, %v1373
        %v1375 = vpop.f32.mrb[0].mxu0
        %v1376 = vpop.f32.mrb[0].mxu0
        %v1377 = vadd.f32 0.0, %v1376
        %v1378 = vpop.f32.mrb[0].mxu0
        %1379 = vmatprep.mubr.bf16.mxu0 0
        %1380 = vmatmul.mubr.bf16.gmra.mrb[0].mxu0 %v1265
        %v1381 = vpop.f32.mrb[0].mxu0
        %v1382 = vadd.f32 0.0, %v1381
        %v1383 = vpop.f32.mrb[0].mxu0
        %v1384 = vpop.f32.mrb[0].mxu0
        %v1385 = vadd.f32 0.0, %v1384
        %v1386 = vpop.f32.mrb[0].mxu0
        %1387 = vmatprep.mubr.bf16.mxu0 0
        %1388 = vmatmul.mubr.bf16.gmra.mrb[0].mxu0 %v1268
        %v1389 = vpop.f32.mrb[0].mxu0
        %v1390 = vadd.f32 0.0, %v1389
        %v1391 = vpop.f32.mrb[0].mxu0
        %v1392 = vpop.f32.mrb[0].mxu0
        %v1393 = vadd.f32 0.0, %v1392
        %v1394 = vpop.f32.mrb[0].mxu0
        %1395 = vmatprep.mubr.bf16.mxu0 0
        %1396 = vmatmul.mubr.bf16.gmra.mrb[0].mxu0 %v1271
        %v1397 = vpop.f32.mrb[0].mxu0
        %v1398 = vadd.f32 0.0, %v1397
        %v1399 = vpop.f32.mrb[0].mxu0
        %v1400 = vpop.f32.mrb[0].mxu0
        %v1401 = vadd.f32 0.0, %v1400
        %v1402 = vpop.f32.mrb[0].mxu0
        %1403 = vmatprep.mubr.bf16.mxu0 0
        %1404 = vmatmul.mubr.bf16.gmra.mrb[0].mxu0 %v1274
        %v1405 = vpop.f32.mrb[0].mxu0
        %v1406 = vadd.f32 0.0, %v1405
        %v1407 = vpop.f32.mrb[0].mxu0
        %v1408 = vpop.f32.mrb[0].mxu0
        %v1409 = vadd.f32 0.0, %v1408
        %v1410 = vpop.f32.mrb[0].mxu0
        %1411 = vmatprep.mubr.bf16.mxu0 0
        %1412 = vmatmul.mubr.bf16.gmra.mrb[0].mxu0 %v1277
        %v1413 = vpop.f32.mrb[0].mxu0
        %v1414 = vadd.f32 0.0, %v1413
        %v1415 = vpop.f32.mrb[0].mxu0
        %v1416 = vpop.f32.mrb[0].mxu0
        %v1417 = vadd.f32 0.0, %v1416
        %v1418 = vpop.f32.mrb[0].mxu0
        %1419 = vmatprep.mubr.bf16.mxu0 0
        %1420 = vmatmul.mubr.bf16.gmra.mrb[0].mxu0 %v1280
        %v1421 = vpop.f32.mrb[0].mxu0
        %v1422 = vadd.f32 0.0, %v1421
        %v1423 = vpop.f32.mrb[0].mxu0
        %v1424 = vpop.f32.mrb[0].mxu0
        %v1425 = vadd.f32 0.0, %v1424
        %v1426 = vpop.f32.mrb[0].mxu0
        %1427 = vmatprep.mubr.bf16.mxu0 0
        %1428 = vmatmul.mubr.bf16.gmra.mrb[0].mxu0 %v1283
        %v1429 = vpop.f32.mrb[0].mxu0
        %v1430 = vadd.f32 0.0, %v1429
        %v1431 = vpop.f32.mrb[0].mxu0
        %v1432 = vpop.f32.mrb[0].mxu0
        %v1433 = vadd.f32 0.0, %v1432
        %v1434 = vpop.f32.mrb[0].mxu0
        %1435 = vmatprep.mubr.bf16.mxu0 0
        %1436 = vmatmul.mubr.bf16.gmra.mrb[0].mxu0 %v1286
        %v1437 = vpop.f32.mrb[0].mxu0
        %v1438 = vadd.f32 0.0, %v1437
        %v1439 = vpop.f32.mrb[0].mxu0
        %v1440 = vpop.f32.mrb[0].mxu0
        %v1441 = vadd.f32 0.0, %v1440
        %v1442 = vpop.f32.mrb[0].mxu0
        %1443 = vmatprep.mubr.bf16.mxu0 0
        %1444 = vmatmul.mubr.bf16.gmra.mrb[0].mxu0 %v1289
        %v1445 = vpop.f32.mrb[0].mxu0
        %v1446 = vadd.f32 0.0, %v1445
        %v1447 = vpop.f32.mrb[0].mxu0
        %v1448 = vpop.f32.mrb[0].mxu0
        %v1449 = vadd.f32 0.0, %v1448
        %v1450 = vpop.f32.mrb[0].mxu0
        %1451 = vdwg.mxu0
        %v1452 = vld [vmem:[%s409] sm:$0xf]
        %v1453 = vld [vmem:[%s409 + $0x4] sm:$0xf]
        %v1454 = vld [vmem:[%s409 + $0x8] sm:$0xf]
        %v1455 = vld [vmem:[%s409 + $0xc] sm:$0xf]
        %v1456 = vld [vmem:[%s409 + $0x10] sm:$0xf]
        %v1457 = vld [vmem:[%s409 + $0x14] sm:$0xf]
        %v1458 = vld [vmem:[%s409 + $0x18] sm:$0xf]
        %v1459 = vld [vmem:[%s409 + $0x1c] sm:$0xf]
        %v1460 = vld [vmem:[%s409 + $0x20] sm:$0xf]
        %v1461 = vld [vmem:[%s409 + $0x24] sm:$0xf]
        %v1462 = vld [vmem:[%s409 + $0x28] sm:$0xf]
        %v1463 = vld [vmem:[%s409 + $0x2c] sm:$0xf]
        %v1464 = vld [vmem:[%s409 + $0x30] sm:$0xf]
        %v1465 = vld [vmem:[%s409 + $0x34] sm:$0xf]
        %v1466 = vld [vmem:[%s409 + $0x38] sm:$0xf]
        %v1467 = vld [vmem:[%s409 + $0x3c] sm:$0xf]
        %v1468 = vld [vmem:[%s409 + $0x40] sm:$0xf]
        %v1469 = vld [vmem:[%s409 + $0x44] sm:$0xf]
        %v1470 = vld [vmem:[%s409 + $0x48] sm:$0xf]
        %v1471 = vld [vmem:[%s409 + $0x4c] sm:$0xf]
        %v1472 = vld [vmem:[%s409 + $0x50] sm:$0xf]
        %v1473 = vld [vmem:[%s409 + $0x54] sm:$0xf]
        %v1474 = vld [vmem:[%s409 + $0x58] sm:$0xf]
        %v1475 = vld [vmem:[%s409 + $0x5c] sm:$0xf]
        %v1476 = vld [vmem:[%s409 + $0x60] sm:$0xf]
        %v1477 = vld [vmem:[%s409 + $0x64] sm:$0xf]
        %v1478 = vld [vmem:[%s409 + $0x68] sm:$0xf]
        %v1479 = vld [vmem:[%s409 + $0x6c] sm:$0xf]
        %v1480 = vld [vmem:[%s409 + $0x70] sm:$0xf]
        %v1481 = vld [vmem:[%s409 + $0x74] sm:$0xf]
        %v1482 = vld [vmem:[%s409 + $0x78] sm:$0xf]
        %v1483 = vld [vmem:[%s409 + $0x7c] sm:$0xf]
        %v1484 = vld [vmem:[%s7] sm:$0xf]
        %v1517 = vunpack.c.l.b16 %v1452
        %v1518 = vunpack.c.l.b16 %v1453
        %v1519 = vunpack.c.l.b16 %v1454
        %v1520 = vunpack.c.l.b16 %v1455
        %v1521 = vunpack.c.l.b16 %v1456
        %v1522 = vunpack.c.l.b16 %v1457
        %v1523 = vunpack.c.l.b16 %v1458
        %v1524 = vunpack.c.l.b16 %v1459
        %v1525 = vunpack.c.l.b16 %v1460
        %v1526 = vunpack.c.l.b16 %v1461
        %v1527 = vunpack.c.l.b16 %v1462
        %v1528 = vunpack.c.l.b16 %v1463
        %v1529 = vunpack.c.l.b16 %v1464
        %v1530 = vunpack.c.l.b16 %v1465
        %v1531 = vunpack.c.l.b16 %v1466
        %v1532 = vunpack.c.l.b16 %v1467
        %v1533 = vunpack.c.l.b16 %v1468
        %v1534 = vunpack.c.l.b16 %v1469
        %v1535 = vunpack.c.l.b16 %v1470
        %v1536 = vunpack.c.l.b16 %v1471
        %v1537 = vunpack.c.l.b16 %v1472
        %v1538 = vunpack.c.l.b16 %v1473
        %v1539 = vunpack.c.l.b16 %v1474
        %v1540 = vunpack.c.l.b16 %v1475
        %v1541 = vunpack.c.l.b16 %v1476
        %v1542 = vunpack.c.l.b16 %v1477
        %v1543 = vunpack.c.l.b16 %v1478
        %v1544 = vunpack.c.l.b16 %v1479
        %v1545 = vunpack.c.l.b16 %v1480
        %v1546 = vunpack.c.l.b16 %v1481
        %v1547 = vunpack.c.l.b16 %v1482
        %v1548 = vunpack.c.l.b16 %v1483
        %v1549 = vpack.c.b16 %v1518, %v1517
        %v1550 = vpack.c.b16 %v1520, %v1519
        %v1551 = vpack.c.b16 %v1522, %v1521
        %v1552 = vpack.c.b16 %v1524, %v1523
        %v1553 = vpack.c.b16 %v1526, %v1525
        %v1554 = vpack.c.b16 %v1528, %v1527
        %v1555 = vpack.c.b16 %v1530, %v1529
        %v1556 = vpack.c.b16 %v1532, %v1531
        %v1557 = vpack.c.b16 %v1534, %v1533
        %v1558 = vpack.c.b16 %v1536, %v1535
        %v1559 = vpack.c.b16 %v1538, %v1537
        %v1560 = vpack.c.b16 %v1540, %v1539
        %v1561 = vpack.c.b16 %v1542, %v1541
        %v1562 = vpack.c.b16 %v1544, %v1543
        %v1563 = vpack.c.b16 %v1546, %v1545
        %v1564 = vpack.c.b16 %v1548, %v1547
        %vm1565 = vcmask 64512
        %v1567 = vsel %vm1565, %v1549, 0
        %v1570 = vsel %vm1565, %v1550, 0
        %v1573 = vsel %vm1565, %v1551, 0
        %v1576 = vsel %vm1565, %v1552, 0
        %v1579 = vsel %vm1565, %v1553, 0
        %v1582 = vsel %vm1565, %v1554, 0
        %v1585 = vsel %vm1565, %v1555, 0
        %v1588 = vsel %vm1565, %v1556, 0
        %v1591 = vsel %vm1565, %v1557, 0
        %v1594 = vsel %vm1565, %v1558, 0
        %v1597 = vsel %vm1565, %v1559, 0
        %v1600 = vsel %vm1565, %v1560, 0
        %v1603 = vsel %vm1565, %v1561, 0
        %v1606 = vsel %vm1565, %v1562, 0
        %v1609 = vsel %vm1565, %v1563, 0
        %v1612 = vsel %vm1565, %v1564, 0
        %vm1614 = vcmask 1043456
        %v1616 = vsel %vm1614, %v1484, 0
        %1618 = vmatprep.subr.bf16.mxu0 0
        %1619 = vmatpush1.bf16.msra.mxu0 %v1616
        %1620 = vmatprep.subr.bf16.mxu0 0
        %1621 = vmatpush1.bf16.msra.mxu0 0
        %1622 = vmatprep.subr.bf16.mxu0 0
        %1623 = vmatpush1.bf16.msra.mxu0 0
        %1624 = vmatprep.subr.bf16.mxu0 0
        %1625 = vmatpush1.bf16.msra.mxu0 0
        %1626 = vmatprep.subr.bf16.mxu0 0
        %1627 = vmatpush1.bf16.msra.mxu0 0
        %1628 = vmatprep.subr.bf16.mxu0 0
        %1629 = vmatpush1.bf16.msra.mxu0 0
        %1630 = vmatprep.subr.bf16.mxu0 0
        %1631 = vmatpush1.bf16.msra.mxu0 0
        %1632 = vmatprep.subr.bf16.mxu0 0
        %1633 = vmatpush1.bf16.msra.mxu0 0
        %1634 = vmatprep.subr.bf16.mxu0 0
        %1635 = vmatpush1.bf16.msra.mxu0 0
        %1636 = vmatprep.subr.bf16.mxu0 0
        %1637 = vmatpush1.bf16.msra.mxu0 0
        %1638 = vmatprep.subr.bf16.mxu0 0
        %1639 = vmatpush1.bf16.msra.mxu0 0
        %1640 = vmatprep.subr.bf16.mxu0 0
        %1641 = vmatpush1.bf16.msra.mxu0 0
        %1642 = vmatprep.subr.bf16.mxu0 0
        %1643 = vmatpush1.bf16.msra.mxu0 0
        %1644 = vmatprep.subr.bf16.mxu0 0
        %1645 = vmatpush1.bf16.msra.mxu0 0
        %1646 = vmatprep.subr.bf16.mxu0 0
        %1647 = vmatpush1.bf16.msra.mxu0 0
        %1648 = vmatprep.subr.bf16.mxu0 0
        %1649 = vmatpush1.bf16.msra.mxu0 0
        %1650 = vmatprep.mubr.bf16.mxu0 0
        %1651 = vmatmul.mubr.bf16.gmra.mrb[0].mxu0 %v1567
        %v1652 = vpop.f32.mrb[0].mxu0
        %v1653 = vadd.f32 0.0, %v1652
        %v1654 = vpop.f32.mrb[0].mxu0
        %v1655 = vpop.f32.mrb[0].mxu0
        %v1656 = vadd.f32 0.0, %v1655
        %v1657 = vpop.f32.mrb[0].mxu0
        %1658 = vmatprep.mubr.bf16.mxu0 0
        %1659 = vmatmul.mubr.bf16.gmra.mrb[0].mxu0 %v1570
        %v1660 = vpop.f32.mrb[0].mxu0
        %v1661 = vadd.f32 0.0, %v1660
        %v1662 = vpop.f32.mrb[0].mxu0
        %v1663 = vpop.f32.mrb[0].mxu0
        %v1664 = vadd.f32 0.0, %v1663
        %v1665 = vpop.f32.mrb[0].mxu0
        %1666 = vmatprep.mubr.bf16.mxu0 0
        %1667 = vmatmul.mubr.bf16.gmra.mrb[0].mxu0 %v1573
        %v1668 = vpop.f32.mrb[0].mxu0
        %v1669 = vadd.f32 0.0, %v1668
        %v1670 = vpop.f32.mrb[0].mxu0
        %v1671 = vpop.f32.mrb[0].mxu0
        %v1672 = vadd.f32 0.0, %v1671
        %v1673 = vpop.f32.mrb[0].mxu0
        %1674 = vmatprep.mubr.bf16.mxu0 0
        %1675 = vmatmul.mubr.bf16.gmra.mrb[0].mxu0 %v1576
        %v1676 = vpop.f32.mrb[0].mxu0
        %v1677 = vadd.f32 0.0, %v1676
        %v1678 = vpop.f32.mrb[0].mxu0
        %v1679 = vpop.f32.mrb[0].mxu0
        %v1680 = vadd.f32 0.0, %v1679
        %v1681 = vpop.f32.mrb[0].mxu0
        %1682 = vmatprep.mubr.bf16.mxu0 0
        %1683 = vmatmul.mubr.bf16.gmra.mrb[0].mxu0 %v1579
        %v1684 = vpop.f32.mrb[0].mxu0
        %v1685 = vadd.f32 0.0, %v1684
        %v1686 = vpop.f32.mrb[0].mxu0
        %v1687 = vpop.f32.mrb[0].mxu0
        %v1688 = vadd.f32 0.0, %v1687
        %v1689 = vpop.f32.mrb[0].mxu0
        %1690 = vmatprep.mubr.bf16.mxu0 0
        %1691 = vmatmul.mubr.bf16.gmra.mrb[0].mxu0 %v1582
        %v1692 = vpop.f32.mrb[0].mxu0
        %v1693 = vadd.f32 0.0, %v1692
        %v1694 = vpop.f32.mrb[0].mxu0
        %v1695 = vpop.f32.mrb[0].mxu0
        %v1696 = vadd.f32 0.0, %v1695
        %v1697 = vpop.f32.mrb[0].mxu0
        %1698 = vmatprep.mubr.bf16.mxu0 0
        %1699 = vmatmul.mubr.bf16.gmra.mrb[0].mxu0 %v1585
        %v1700 = vpop.f32.mrb[0].mxu0
        %v1701 = vadd.f32 0.0, %v1700
        %v1702 = vpop.f32.mrb[0].mxu0
        %v1703 = vpop.f32.mrb[0].mxu0
        %v1704 = vadd.f32 0.0, %v1703
        %v1705 = vpop.f32.mrb[0].mxu0
        %1706 = vmatprep.mubr.bf16.mxu0 0
        %1707 = vmatmul.mubr.bf16.gmra.mrb[0].mxu0 %v1588
        %v1708 = vpop.f32.mrb[0].mxu0
        %v1709 = vadd.f32 0.0, %v1708
        %v1710 = vpop.f32.mrb[0].mxu0
        %v1711 = vpop.f32.mrb[0].mxu0
        %v1712 = vadd.f32 0.0, %v1711
        %v1713 = vpop.f32.mrb[0].mxu0
        %1714 = vmatprep.mubr.bf16.mxu0 0
        %1715 = vmatmul.mubr.bf16.gmra.mrb[0].mxu0 %v1591
        %v1716 = vpop.f32.mrb[0].mxu0
        %v1717 = vadd.f32 0.0, %v1716
        %v1718 = vpop.f32.mrb[0].mxu0
        %v1719 = vpop.f32.mrb[0].mxu0
        %v1720 = vadd.f32 0.0, %v1719
        %v1721 = vpop.f32.mrb[0].mxu0
        %1722 = vmatprep.mubr.bf16.mxu0 0
        %1723 = vmatmul.mubr.bf16.gmra.mrb[0].mxu0 %v1594
        %v1724 = vpop.f32.mrb[0].mxu0
        %v1725 = vadd.f32 0.0, %v1724
        %v1726 = vpop.f32.mrb[0].mxu0
        %v1727 = vpop.f32.mrb[0].mxu0
        %v1728 = vadd.f32 0.0, %v1727
        %v1729 = vpop.f32.mrb[0].mxu0
        %1730 = vmatprep.mubr.bf16.mxu0 0
        %1731 = vmatmul.mubr.bf16.gmra.mrb[0].mxu0 %v1597
        %v1732 = vpop.f32.mrb[0].mxu0
        %v1733 = vadd.f32 0.0, %v1732
        %v1734 = vpop.f32.mrb[0].mxu0
        %v1735 = vpop.f32.mrb[0].mxu0
        %v1736 = vadd.f32 0.0, %v1735
        %v1737 = vpop.f32.mrb[0].mxu0
        %1738 = vmatprep.mubr.bf16.mxu0 0
        %1739 = vmatmul.mubr.bf16.gmra.mrb[0].mxu0 %v1600
        %v1740 = vpop.f32.mrb[0].mxu0
        %v1741 = vadd.f32 0.0, %v1740
        %v1742 = vpop.f32.mrb[0].mxu0
        %v1743 = vpop.f32.mrb[0].mxu0
        %v1744 = vadd.f32 0.0, %v1743
        %v1745 = vpop.f32.mrb[0].mxu0
        %1746 = vmatprep.mubr.bf16.mxu0 0
        %1747 = vmatmul.mubr.bf16.gmra.mrb[0].mxu0 %v1603
        %v1748 = vpop.f32.mrb[0].mxu0
        %v1749 = vadd.f32 0.0, %v1748
        %v1750 = vpop.f32.mrb[0].mxu0
        %v1751 = vpop.f32.mrb[0].mxu0
        %v1752 = vadd.f32 0.0, %v1751
        %v1753 = vpop.f32.mrb[0].mxu0
        %1754 = vmatprep.mubr.bf16.mxu0 0
        %1755 = vmatmul.mubr.bf16.gmra.mrb[0].mxu0 %v1606
        %v1756 = vpop.f32.mrb[0].mxu0
        %v1757 = vadd.f32 0.0, %v1756
        %v1758 = vpop.f32.mrb[0].mxu0
        %v1759 = vpop.f32.mrb[0].mxu0
        %v1760 = vadd.f32 0.0, %v1759
        %v1761 = vpop.f32.mrb[0].mxu0
        %1762 = vmatprep.mubr.bf16.mxu0 0
        %1763 = vmatmul.mubr.bf16.gmra.mrb[0].mxu0 %v1609
        %v1764 = vpop.f32.mrb[0].mxu0
        %v1765 = vadd.f32 0.0, %v1764
        %v1766 = vpop.f32.mrb[0].mxu0
        %v1767 = vpop.f32.mrb[0].mxu0
        %v1768 = vadd.f32 0.0, %v1767
        %v1769 = vpop.f32.mrb[0].mxu0
        %1770 = vmatprep.mubr.bf16.mxu0 0
        %1771 = vmatmul.mubr.bf16.gmra.mrb[0].mxu0 %v1612
        %v1772 = vpop.f32.mrb[0].mxu0
        %v1773 = vadd.f32 0.0, %v1772
        %v1774 = vpop.f32.mrb[0].mxu0
        %v1775 = vpop.f32.mrb[0].mxu0
        %v1776 = vadd.f32 0.0, %v1775
        %v1777 = vpop.f32.mrb[0].mxu0
        %1778 = vdwg.mxu0
        %v1780 = vsel %vm1242, %v978, 0
        %v1783 = vsel %vm1242, %v979, 0
        %v1786 = vsel %vm1242, %v980, 0
        %v1789 = vsel %vm1242, %v981, 0
        %v1792 = vsel %vm1242, %v982, 0
        %v1795 = vsel %vm1242, %v983, 0
        %v1798 = vsel %vm1242, %v984, 0
        %v1801 = vsel %vm1242, %v985, 0
        %v1804 = vsel %vm1242, %v986, 0
        %v1807 = vsel %vm1242, %v987, 0
        %v1810 = vsel %vm1242, %v988, 0
        %v1813 = vsel %vm1242, %v989, 0
        %v1816 = vsel %vm1242, %v990, 0
        %v1819 = vsel %vm1242, %v991, 0
        %v1822 = vsel %vm1242, %v992, 0
        %v1825 = vsel %vm1242, %v993, 0
        %1827 = vmatprep.subr.bf16.mxu0 0
        %1828 = vmatpush1.bf16.msra.mxu0 %v1234
        %1829 = vmatprep.subr.bf16.mxu0 0
        %1830 = vmatpush1.bf16.msra.mxu0 %v1235
        %1831 = vmatprep.subr.bf16.mxu0 0
        %1832 = vmatpush1.bf16.msra.mxu0 %v1236
        %1833 = vmatprep.subr.bf16.mxu0 0
        %1834 = vmatpush1.bf16.msra.mxu0 %v1237
        %1835 = vmatprep.subr.bf16.mxu0 0
        %1836 = vmatpush1.bf16.msra.mxu0 0
        %1837 = vmatprep.subr.bf16.mxu0 0
        %1838 = vmatpush1.bf16.msra.mxu0 0
        %1839 = vmatprep.subr.bf16.mxu0 0
        %1840 = vmatpush1.bf16.msra.mxu0 0
        %1841 = vmatprep.subr.bf16.mxu0 0
        %1842 = vmatpush1.bf16.msra.mxu0 0
        %1843 = vmatprep.subr.bf16.mxu0 0
        %1844 = vmatpush1.bf16.msra.mxu0 0
        %1845 = vmatprep.subr.bf16.mxu0 0
        %1846 = vmatpush1.bf16.msra.mxu0 0
        %1847 = vmatprep.subr.bf16.mxu0 0
        %1848 = vmatpush1.bf16.msra.mxu0 0
        %1849 = vmatprep.subr.bf16.mxu0 0
        %1850 = vmatpush1.bf16.msra.mxu0 0
        %1851 = vmatprep.subr.bf16.mxu0 0
        %1852 = vmatpush1.bf16.msra.mxu0 0
        %1853 = vmatprep.subr.bf16.mxu0 0
        %1854 = vmatpush1.bf16.msra.mxu0 0
        %1855 = vmatprep.subr.bf16.mxu0 0
        %1856 = vmatpush1.bf16.msra.mxu0 0
        %1857 = vmatprep.subr.bf16.mxu0 0
        %1858 = vmatpush1.bf16.msra.mxu0 0
        %1859 = vmatprep.mubr.bf16.mxu0 0
        %1860 = vmatmul.mubr.bf16.gmra.mrb[0].mxu0 %v1780
        %v1861 = vpop.f32.mrb[0].mxu0
        %v1862 = vadd.f32 %v1326, %v1861
        %v1863 = vpop.f32.mrb[0].mxu0
        %v1864 = vpop.f32.mrb[0].mxu0
        %v1865 = vadd.f32 %v1329, %v1864
        %v1866 = vpop.f32.mrb[0].mxu0
        %1867 = vmatprep.mubr.bf16.mxu0 0
        %1868 = vmatmul.mubr.bf16.gmra.mrb[0].mxu0 %v1783
        %v1869 = vpop.f32.mrb[0].mxu0
        %v1870 = vadd.f32 %v1334, %v1869
        %v1871 = vpop.f32.mrb[0].mxu0
        %v1872 = vpop.f32.mrb[0].mxu0
        %v1873 = vadd.f32 %v1337, %v1872
        %v1874 = vpop.f32.mrb[0].mxu0
        %1875 = vmatprep.mubr.bf16.mxu0 0
        %1876 = vmatmul.mubr.bf16.gmra.mrb[0].mxu0 %v1786
        %v1877 = vpop.f32.mrb[0].mxu0
        %v1878 = vadd.f32 %v1342, %v1877
        %v1879 = vpop.f32.mrb[0].mxu0
        %v1880 = vpop.f32.mrb[0].mxu0
        %v1881 = vadd.f32 %v1345, %v1880
        %v1882 = vpop.f32.mrb[0].mxu0
        %1883 = vmatprep.mubr.bf16.mxu0 0
        %1884 = vmatmul.mubr.bf16.gmra.mrb[0].mxu0 %v1789
        %v1885 = vpop.f32.mrb[0].mxu0
        %v1886 = vadd.f32 %v1350, %v1885
        %v1887 = vpop.f32.mrb[0].mxu0
        %v1888 = vpop.f32.mrb[0].mxu0
        %v1889 = vadd.f32 %v1353, %v1888
        %v1890 = vpop.f32.mrb[0].mxu0
        %1891 = vmatprep.mubr.bf16.mxu0 0
        %1892 = vmatmul.mubr.bf16.gmra.mrb[0].mxu0 %v1792
        %v1893 = vpop.f32.mrb[0].mxu0
        %v1894 = vadd.f32 %v1358, %v1893
        %v1895 = vpop.f32.mrb[0].mxu0
        %v1896 = vpop.f32.mrb[0].mxu0
        %v1897 = vadd.f32 %v1361, %v1896
        %v1898 = vpop.f32.mrb[0].mxu0
        %1899 = vmatprep.mubr.bf16.mxu0 0
        %1900 = vmatmul.mubr.bf16.gmra.mrb[0].mxu0 %v1795
        %v1901 = vpop.f32.mrb[0].mxu0
        %v1902 = vadd.f32 %v1366, %v1901
        %v1903 = vpop.f32.mrb[0].mxu0
        %v1904 = vpop.f32.mrb[0].mxu0
        %v1905 = vadd.f32 %v1369, %v1904
        %v1906 = vpop.f32.mrb[0].mxu0
        %1907 = vmatprep.mubr.bf16.mxu0 0
        %1908 = vmatmul.mubr.bf16.gmra.mrb[0].mxu0 %v1798
        %v1909 = vpop.f32.mrb[0].mxu0
        %v1910 = vadd.f32 %v1374, %v1909
        %v1911 = vpop.f32.mrb[0].mxu0
        %v1912 = vpop.f32.mrb[0].mxu0
        %v1913 = vadd.f32 %v1377, %v1912
        %v1914 = vpop.f32.mrb[0].mxu0
        %1915 = vmatprep.mubr.bf16.mxu0 0
        %1916 = vmatmul.mubr.bf16.gmra.mrb[0].mxu0 %v1801
        %v1917 = vpop.f32.mrb[0].mxu0
        %v1918 = vadd.f32 %v1382, %v1917
        %v1919 = vpop.f32.mrb[0].mxu0
        %v1920 = vpop.f32.mrb[0].mxu0
        %v1921 = vadd.f32 %v1385, %v1920
        %v1922 = vpop.f32.mrb[0].mxu0
        %1923 = vmatprep.mubr.bf16.mxu0 0
        %1924 = vmatmul.mubr.bf16.gmra.mrb[0].mxu0 %v1804
        %v1925 = vpop.f32.mrb[0].mxu0
        %v1926 = vadd.f32 %v1390, %v1925
        %v1927 = vpop.f32.mrb[0].mxu0
        %v1928 = vpop.f32.mrb[0].mxu0
        %v1929 = vadd.f32 %v1393, %v1928
        %v1930 = vpop.f32.mrb[0].mxu0
        %1931 = vmatprep.mubr.bf16.mxu0 0
        %1932 = vmatmul.mubr.bf16.gmra.mrb[0].mxu0 %v1807
        %v1933 = vpop.f32.mrb[0].mxu0
        %v1934 = vadd.f32 %v1398, %v1933
        %v1935 = vpop.f32.mrb[0].mxu0
        %v1936 = vpop.f32.mrb[0].mxu0
        %v1937 = vadd.f32 %v1401, %v1936
        %v1938 = vpop.f32.mrb[0].mxu0
        %1939 = vmatprep.mubr.bf16.mxu0 0
        %1940 = vmatmul.mubr.bf16.gmra.mrb[0].mxu0 %v1810
        %v1941 = vpop.f32.mrb[0].mxu0
        %v1942 = vadd.f32 %v1406, %v1941
        %v1943 = vpop.f32.mrb[0].mxu0
        %v1944 = vpop.f32.mrb[0].mxu0
        %v1945 = vadd.f32 %v1409, %v1944
        %v1946 = vpop.f32.mrb[0].mxu0
        %1947 = vmatprep.mubr.bf16.mxu0 0
        %1948 = vmatmul.mubr.bf16.gmra.mrb[0].mxu0 %v1813
        %v1949 = vpop.f32.mrb[0].mxu0
        %v1950 = vadd.f32 %v1414, %v1949
        %v1951 = vpop.f32.mrb[0].mxu0
        %v1952 = vpop.f32.mrb[0].mxu0
        %v1953 = vadd.f32 %v1417, %v1952
        %v1954 = vpop.f32.mrb[0].mxu0
        %1955 = vmatprep.mubr.bf16.mxu0 0
        %1956 = vmatmul.mubr.bf16.gmra.mrb[0].mxu0 %v1816
        %v1957 = vpop.f32.mrb[0].mxu0
        %v1958 = vadd.f32 %v1422, %v1957
        %v1959 = vpop.f32.mrb[0].mxu0
        %v1960 = vpop.f32.mrb[0].mxu0
        %v1961 = vadd.f32 %v1425, %v1960
        %v1962 = vpop.f32.mrb[0].mxu0
        %1963 = vmatprep.mubr.bf16.mxu0 0
        %1964 = vmatmul.mubr.bf16.gmra.mrb[0].mxu0 %v1819
        %v1965 = vpop.f32.mrb[0].mxu0
        %v1966 = vadd.f32 %v1430, %v1965
        %v1967 = vpop.f32.mrb[0].mxu0
        %v1968 = vpop.f32.mrb[0].mxu0
        %v1969 = vadd.f32 %v1433, %v1968
        %v1970 = vpop.f32.mrb[0].mxu0
        %1971 = vmatprep.mubr.bf16.mxu0 0
        %1972 = vmatmul.mubr.bf16.gmra.mrb[0].mxu0 %v1822
        %v1973 = vpop.f32.mrb[0].mxu0
        %v1974 = vadd.f32 %v1438, %v1973
        %v1975 = vpop.f32.mrb[0].mxu0
        %v1976 = vpop.f32.mrb[0].mxu0
        %v1977 = vadd.f32 %v1441, %v1976
        %v1978 = vpop.f32.mrb[0].mxu0
        %1979 = vmatprep.mubr.bf16.mxu0 0
        %1980 = vmatmul.mubr.bf16.gmra.mrb[0].mxu0 %v1825
        %v1981 = vpop.f32.mrb[0].mxu0
        %v1982 = vadd.f32 %v1446, %v1981
        %v1983 = vpop.f32.mrb[0].mxu0
        %v1984 = vpop.f32.mrb[0].mxu0
        %v1985 = vadd.f32 %v1449, %v1984
        %v1986 = vpop.f32.mrb[0].mxu0
        %1987 = vdwg.mxu0
        %v1988 = vadd.f32 %v1862, %v1653
        %v1989 = vadd.f32 %v1865, %v1656
        %v1990 = vadd.f32 %v1870, %v1661
        %v1991 = vadd.f32 %v1873, %v1664
        %v1992 = vadd.f32 %v1878, %v1669
        %v1993 = vadd.f32 %v1881, %v1672
        %v1994 = vadd.f32 %v1886, %v1677
        %v1995 = vadd.f32 %v1889, %v1680
        %v1996 = vadd.f32 %v1894, %v1685
        %v1997 = vadd.f32 %v1897, %v1688
        %v1998 = vadd.f32 %v1902, %v1693
        %v1999 = vadd.f32 %v1905, %v1696
        %v2000 = vadd.f32 %v1910, %v1701
        %v2001 = vadd.f32 %v1913, %v1704
        %v2002 = vadd.f32 %v1918, %v1709
        %v2003 = vadd.f32 %v1921, %v1712
        %v2004 = vadd.f32 %v1926, %v1717
        %v2005 = vadd.f32 %v1929, %v1720
        %v2006 = vadd.f32 %v1934, %v1725
        %v2007 = vadd.f32 %v1937, %v1728
        %v2008 = vadd.f32 %v1942, %v1733
        %v2009 = vadd.f32 %v1945, %v1736
        %v2010 = vadd.f32 %v1950, %v1741
        %v2011 = vadd.f32 %v1953, %v1744
        %v2012 = vadd.f32 %v1958, %v1749
        %v2013 = vadd.f32 %v1961, %v1752
        %v2014 = vadd.f32 %v1966, %v1757
        %v2015 = vadd.f32 %v1969, %v1760
        %v2016 = vadd.f32 %v1974, %v1765
        %v2017 = vadd.f32 %v1977, %v1768
        %v2018 = vadd.f32 %v1982, %v1773
        %v2019 = vadd.f32 %v1985, %v1776
        %v2020 = vld [vmem:[%s8] sm:$0x1]
        %v2022 = vlaneseq
        %v2023 = vshrl.u32 %v2022, 7
        %v2024 = vsub.s32 0, %v2023
        %v2025 = vrot.slane %v2020, %v2024
        %v2027 = vadd.f32 %v1988, %v2025
        %v2028 = vadd.f32 %v1989, %v2025
        %v2029 = vadd.f32 %v1990, %v2025
        %v2030 = vadd.f32 %v1991, %v2025
        %v2031 = vadd.f32 %v1992, %v2025
        %v2032 = vadd.f32 %v1993, %v2025
        %v2033 = vadd.f32 %v1994, %v2025
        %v2034 = vadd.f32 %v1995, %v2025
        %v2035 = vadd.f32 %v1996, %v2025
        %v2036 = vadd.f32 %v1997, %v2025
        %v2037 = vadd.f32 %v1998, %v2025
        %v2038 = vadd.f32 %v1999, %v2025
        %v2039 = vadd.f32 %v2000, %v2025
        %v2040 = vadd.f32 %v2001, %v2025
        %v2041 = vadd.f32 %v2002, %v2025
        %v2042 = vadd.f32 %v2003, %v2025
        %v2043 = vadd.f32 %v2004, %v2025
        %v2044 = vadd.f32 %v2005, %v2025
        %v2045 = vadd.f32 %v2006, %v2025
        %v2046 = vadd.f32 %v2007, %v2025
        %v2047 = vadd.f32 %v2008, %v2025
        %v2048 = vadd.f32 %v2009, %v2025
        %v2049 = vadd.f32 %v2010, %v2025
        %v2050 = vadd.f32 %v2011, %v2025
        %v2051 = vadd.f32 %v2012, %v2025
        %v2052 = vadd.f32 %v2013, %v2025
        %v2053 = vadd.f32 %v2014, %v2025
        %v2054 = vadd.f32 %v2015, %v2025
        %v2055 = vadd.f32 %v2016, %v2025
        %v2056 = vadd.f32 %v2017, %v2025
        %v2057 = vadd.f32 %v2018, %v2025
        %v2058 = vadd.f32 %v2019, %v2025
        %v2059 = vmax.f32 %v2027, 0.0
        %v2060 = vmax.f32 %v2028, 0.0
        %v2061 = vmax.f32 %v2029, 0.0
        %v2062 = vmax.f32 %v2030, 0.0
        %v2063 = vmax.f32 %v2031, 0.0
        %v2064 = vmax.f32 %v2032, 0.0
        %v2065 = vmax.f32 %v2033, 0.0
        %v2066 = vmax.f32 %v2034, 0.0
        %v2067 = vmax.f32 %v2035, 0.0
        %v2068 = vmax.f32 %v2036, 0.0
        %v2069 = vmax.f32 %v2037, 0.0
        %v2070 = vmax.f32 %v2038, 0.0
        %v2071 = vmax.f32 %v2039, 0.0
        %v2072 = vmax.f32 %v2040, 0.0
        %v2073 = vmax.f32 %v2041, 0.0
        %v2074 = vmax.f32 %v2042, 0.0
        %v2075 = vmax.f32 %v2043, 0.0
        %v2076 = vmax.f32 %v2044, 0.0
        %v2077 = vmax.f32 %v2045, 0.0
        %v2078 = vmax.f32 %v2046, 0.0
        %v2079 = vmax.f32 %v2047, 0.0
        %v2080 = vmax.f32 %v2048, 0.0
        %v2081 = vmax.f32 %v2049, 0.0
        %v2082 = vmax.f32 %v2050, 0.0
        %v2083 = vmax.f32 %v2051, 0.0
        %v2084 = vmax.f32 %v2052, 0.0
        %v2085 = vmax.f32 %v2053, 0.0
        %v2086 = vmax.f32 %v2054, 0.0
        %v2087 = vmax.f32 %v2055, 0.0
        %v2088 = vmax.f32 %v2056, 0.0
        %v2089 = vmax.f32 %v2057, 0.0
        %v2090 = vmax.f32 %v2058, 0.0
        %v2091 = vld [vmem:[#allocation7] sm:$0xff]
        %v2092 = vld [vmem:[#allocation7 + $0x8] sm:$0xff]
        %v2093 = vld [vmem:[#allocation7 + $0x10] sm:$0xff]
        %v2094 = vld [vmem:[#allocation7 + $0x18] sm:$0xff]
        %v2095 = vld [vmem:[#allocation7 + $0x20] sm:$0xff]
        %v2096 = vld [vmem:[#allocation7 + $0x28] sm:$0xff]
        %v2097 = vld [vmem:[#allocation7 + $0x30] sm:$0xff]
        %v2098 = vld [vmem:[#allocation7 + $0x38] sm:$0xff]
        %v2099 = vld [vmem:[#allocation7 + $0x40] sm:$0xff]
        %v2100 = vld [vmem:[#allocation7 + $0x48] sm:$0xff]
        %v2101 = vld [vmem:[#allocation7 + $0x50] sm:$0xff]
        %v2102 = vld [vmem:[#allocation7 + $0x58] sm:$0xff]
        %v2103 = vld [vmem:[#allocation7 + $0x60] sm:$0xff]
        %v2104 = vld [vmem:[#allocation7 + $0x68] sm:$0xff]
        %v2105 = vld [vmem:[#allocation7 + $0x70] sm:$0xff]
        %v2106 = vld [vmem:[#allocation7 + $0x78] sm:$0xff]
        %v2107 = vld [vmem:[%s403] sm:$0x3]
        %v2108 = vlaneseq
        %v2109 = vshrl.u32 %v2108, 7
        %v2110 = vsub.s32 0, %v2109
        %v2111 = vrot.slane %v2107, %v2110
        %v2112 = vlaneseq
        %v2113 = vshrl.u32 %v2112, 7
        %v2114 = vsub.s32 1, %v2113
        %v2115 = vrot.slane %v2107, %v2114
        %vm2116 = vcmp.eq.s32.totalorder %v2091, %v2111
        %vm2117 = vcmp.eq.s32.totalorder %v2092, %v2115
        %vm2118 = vcmp.eq.s32.totalorder %v2093, %v2111
        %vm2119 = vcmp.eq.s32.totalorder %v2094, %v2115
        %vm2120 = vcmp.eq.s32.totalorder %v2095, %v2111
        %vm2121 = vcmp.eq.s32.totalorder %v2096, %v2115
        %vm2122 = vcmp.eq.s32.totalorder %v2097, %v2111
        %vm2123 = vcmp.eq.s32.totalorder %v2098, %v2115
        %vm2124 = vcmp.eq.s32.totalorder %v2099, %v2111
        %vm2125 = vcmp.eq.s32.totalorder %v2100, %v2115
        %vm2126 = vcmp.eq.s32.totalorder %v2101, %v2111
        %vm2127 = vcmp.eq.s32.totalorder %v2102, %v2115
        %vm2128 = vcmp.eq.s32.totalorder %v2103, %v2111
        %vm2129 = vcmp.eq.s32.totalorder %v2104, %v2115
        %vm2130 = vcmp.eq.s32.totalorder %v2105, %v2111
        %vm2131 = vcmp.eq.s32.totalorder %v2106, %v2115
        %v2132 = vsel %vm2116, 1, 0
        %v2133 = vsel %vm2117, 1, 0
        %v2134 = vsel %vm2118, 1, 0
        %v2135 = vsel %vm2119, 1, 0
        %v2136 = vsel %vm2120, 1, 0
        %v2137 = vsel %vm2121, 1, 0
        %v2138 = vsel %vm2122, 1, 0
        %v2139 = vsel %vm2123, 1, 0
        %v2140 = vsel %vm2124, 1, 0
        %v2141 = vsel %vm2125, 1, 0
        %v2142 = vsel %vm2126, 1, 0
        %v2143 = vsel %vm2127, 1, 0
        %v2144 = vsel %vm2128, 1, 0
        %v2145 = vsel %vm2129, 1, 0
        %v2146 = vsel %vm2130, 1, 0
        %v2147 = vsel %vm2131, 1, 0
        %v2148 = vcvt.s32.f32 %v2132
        %v2149 = vcvt.s32.f32 %v2133
        %v2150 = vcvt.s32.f32 %v2134
        %v2151 = vcvt.s32.f32 %v2135
        %v2152 = vcvt.s32.f32 %v2136
        %v2153 = vcvt.s32.f32 %v2137
        %v2154 = vcvt.s32.f32 %v2138
        %v2155 = vcvt.s32.f32 %v2139
        %v2156 = vcvt.s32.f32 %v2140
        %v2157 = vcvt.s32.f32 %v2141
        %v2158 = vcvt.s32.f32 %v2142
        %v2159 = vcvt.s32.f32 %v2143
        %v2160 = vcvt.s32.f32 %v2144
        %v2161 = vcvt.s32.f32 %v2145
        %v2162 = vcvt.s32.f32 %v2146
        %v2163 = vcvt.s32.f32 %v2147
        %v2164 = vpack.c.bf16 %v2150, %v2148
        %v2165 = vpack.c.bf16 %v2151, %v2149
        %v2166 = vpack.c.bf16 %v2154, %v2152
        %v2167 = vpack.c.bf16 %v2155, %v2153
        %v2168 = vpack.c.bf16 %v2158, %v2156
        %v2169 = vpack.c.bf16 %v2159, %v2157
        %v2170 = vpack.c.bf16 %v2162, %v2160
        %v2171 = vpack.c.bf16 %v2163, %v2161
        %v2172 = vld [vmem:[#allocation5] sm:$0xff]
        %v2173 = vld [vmem:[#allocation5 + $0x8] sm:$0xff]
        %v2174 = vld [vmem:[#allocation5 + $0x10] sm:$0xff]
        %v2175 = vld [vmem:[#allocation5 + $0x18] sm:$0xff]
        %v2176 = vld [vmem:[#allocation5 + $0x20] sm:$0xff]
        %v2177 = vld [vmem:[#allocation5 + $0x28] sm:$0xff]
        %v2178 = vld [vmem:[#allocation5 + $0x30] sm:$0xff]
        %v2179 = vld [vmem:[#allocation5 + $0x38] sm:$0xff]
        %v2180 = vpack.c.bf16 %v2060, %v2059
        %v2181 = vpack.c.bf16 %v2062, %v2061
        %v2182 = vpack.c.bf16 %v2064, %v2063
        %v2183 = vpack.c.bf16 %v2066, %v2065
        %v2184 = vpack.c.bf16 %v2068, %v2067
        %v2185 = vpack.c.bf16 %v2070, %v2069
        %v2186 = vpack.c.bf16 %v2072, %v2071
        %v2187 = vpack.c.bf16 %v2074, %v2073
        %v2188 = vpack.c.bf16 %v2076, %v2075
        %v2189 = vpack.c.bf16 %v2078, %v2077
        %v2190 = vpack.c.bf16 %v2080, %v2079
        %v2191 = vpack.c.bf16 %v2082, %v2081
        %v2192 = vpack.c.bf16 %v2084, %v2083
        %v2193 = vpack.c.bf16 %v2086, %v2085
        %v2194 = vpack.c.bf16 %v2088, %v2087
        %v2195 = vpack.c.bf16 %v2090, %v2089
        %2196 = vmatprep.subr.bf16.mxu0 0
        %2197 = vmatpush1.bf16.msra.mxu0 %v2180
        %2198 = vmatprep.subr.bf16.mxu0 0
        %2199 = vmatpush1.bf16.msra.mxu0 %v2181
        %2200 = vmatprep.subr.bf16.mxu0 0
        %2201 = vmatpush1.bf16.msra.mxu0 %v2182
        %2202 = vmatprep.subr.bf16.mxu0 0
        %2203 = vmatpush1.bf16.msra.mxu0 %v2183
        %2204 = vmatprep.subr.bf16.mxu0 0
        %2205 = vmatpush1.bf16.msra.mxu0 %v2184
        %2206 = vmatprep.subr.bf16.mxu0 0
        %2207 = vmatpush1.bf16.msra.mxu0 %v2185
        %2208 = vmatprep.subr.bf16.mxu0 0
        %2209 = vmatpush1.bf16.msra.mxu0 %v2186
        %2210 = vmatprep.subr.bf16.mxu0 0
        %2211 = vmatpush1.bf16.msra.mxu0 %v2187
        %2212 = vmatprep.subr.bf16.mxu0 0
        %2213 = vmatpush1.bf16.msra.mxu0 %v2188
        %2214 = vmatprep.subr.bf16.mxu0 0
        %2215 = vmatpush1.bf16.msra.mxu0 %v2189
        %2216 = vmatprep.subr.bf16.mxu0 0
        %2217 = vmatpush1.bf16.msra.mxu0 %v2190
        %2218 = vmatprep.subr.bf16.mxu0 0
        %2219 = vmatpush1.bf16.msra.mxu0 %v2191
        %2220 = vmatprep.subr.bf16.mxu0 0
        %2221 = vmatpush1.bf16.msra.mxu0 %v2192
        %2222 = vmatprep.subr.bf16.mxu0 0
        %2223 = vmatpush1.bf16.msra.mxu0 %v2193
        %2224 = vmatprep.subr.bf16.mxu0 0
        %2225 = vmatpush1.bf16.msra.mxu0 %v2194
        %2226 = vmatprep.subr.bf16.mxu0 0
        %2227 = vmatpush1.bf16.msra.mxu0 %v2195
        %2228 = vmatprep.mubr.bf16.mxu0 %v2165
        %2229 = vmatmul.mubr.bf16.gmra.mrb[0].mxu0 %v2164
        %v2230 = vpop.f32.mrb[0].mxu0
        %v2231 = vadd.f32 0.0, %v2230
        %v2232 = vpop.f32.mrb[0].mxu0
        %v2233 = vpop.f32.mrb[0].mxu0
        %v2234 = vadd.f32 0.0, %v2233
        %v2235 = vpop.f32.mrb[0].mxu0
        %2236 = vmatprep.mubr.bf16.mxu0 %v2167
        %2237 = vmatmul.mubr.bf16.gmra.mrb[0].mxu0 %v2166
        %v2238 = vpop.f32.mrb[0].mxu0
        %v2239 = vadd.f32 0.0, %v2238
        %v2240 = vpop.f32.mrb[0].mxu0
        %v2241 = vpop.f32.mrb[0].mxu0
        %v2242 = vadd.f32 0.0, %v2241
        %v2243 = vpop.f32.mrb[0].mxu0
        %2244 = vmatprep.mubr.bf16.mxu0 %v2169
        %2245 = vmatmul.mubr.bf16.gmra.mrb[0].mxu0 %v2168
        %v2246 = vpop.f32.mrb[0].mxu0
        %v2247 = vadd.f32 0.0, %v2246
        %v2248 = vpop.f32.mrb[0].mxu0
        %v2249 = vpop.f32.mrb[0].mxu0
        %v2250 = vadd.f32 0.0, %v2249
        %v2251 = vpop.f32.mrb[0].mxu0
        %2252 = vmatprep.mubr.bf16.mxu0 %v2171
        %2253 = vmatmul.mubr.bf16.gmra.mrb[0].mxu0 %v2170
        %v2254 = vpop.f32.mrb[0].mxu0
        %v2255 = vadd.f32 0.0, %v2254
        %v2256 = vpop.f32.mrb[0].mxu0
        %v2257 = vpop.f32.mrb[0].mxu0
        %v2258 = vadd.f32 0.0, %v2257
        %v2259 = vpop.f32.mrb[0].mxu0
        %2260 = vdwg.mxu0
        %v2261 = vadd.f32 %v2172, %v2231
        %v2262 = vadd.f32 %v2173, %v2234
        %v2263 = vadd.f32 %v2174, %v2239
        %v2264 = vadd.f32 %v2175, %v2242
        %v2265 = vadd.f32 %v2176, %v2247
        %v2266 = vadd.f32 %v2177, %v2250
        %v2267 = vadd.f32 %v2178, %v2255
        %v2268 = vadd.f32 %v2179, %v2258
        %2269 = vst [vmem:[#allocation5] sm:$0xff] %v2261
        %2270 = vst [vmem:[#allocation5 + $0x8] sm:$0xff] %v2262
        %2271 = vst [vmem:[#allocation5 + $0x10] sm:$0xff] %v2263
        %2272 = vst [vmem:[#allocation5 + $0x18] sm:$0xff] %v2264
        %2273 = vst [vmem:[#allocation5 + $0x20] sm:$0xff] %v2265
        %2274 = vst [vmem:[#allocation5 + $0x28] sm:$0xff] %v2266
        %2275 = vst [vmem:[#allocation5 + $0x30] sm:$0xff] %v2267
        %2276 = vst [vmem:[#allocation5 + $0x38] sm:$0xff] %v2268
        %p2277 = scmp.eq.s32.totalorder %s22, 1
        // Predicated region
        $region65: #{scene_construction_forward.1} parent=59 // pred_check
          %p2278 = pneg %p2277
        $region66: #{scene_construction_forward.1} parent=59 // pred_check_branch
          %2280 = sbr.rel (%p2278) target = $region68
        $region67: #{scene_construction_forward.1} parent=59 // pred_region
          %v2281 = vld [vmem:[#allocation5] sm:$0xff]
          %v2282 = vld [vmem:[#allocation5 + $0x8] sm:$0xff]
          %v2283 = vld [vmem:[#allocation5 + $0x10] sm:$0xff]
          %v2284 = vld [vmem:[#allocation5 + $0x18] sm:$0xff]
          %v2285 = vld [vmem:[#allocation5 + $0x20] sm:$0xff]
          %v2286 = vld [vmem:[#allocation5 + $0x28] sm:$0xff]
          %v2287 = vld [vmem:[#allocation5 + $0x30] sm:$0xff]
          %v2288 = vld [vmem:[#allocation5 + $0x38] sm:$0xff]
          %v2289 = vpack.c.bf16 %v2282, %v2281
          %v2290 = vpack.c.bf16 %v2284, %v2283
          %v2291 = vpack.c.bf16 %v2286, %v2285
          %v2292 = vpack.c.bf16 %v2288, %v2287
          %v2293 = vld [vmem:[%s9] sm:$0xf]
          %v2294 = vld [vmem:[%s9 + $0x4] sm:$0xf]
          %v2295 = vld [vmem:[%s9 + $0x8] sm:$0xf]
          %v2296 = vld [vmem:[%s9 + $0xc] sm:$0xf]
          %v2297 = vld [vmem:[%s9 + $0x10] sm:$0xf]
          %v2298 = vld [vmem:[%s9 + $0x14] sm:$0xf]
          %v2299 = vld [vmem:[%s9 + $0x18] sm:$0xf]
          %v2300 = vld [vmem:[%s9 + $0x1c] sm:$0xf]
          %v2301 = vld [vmem:[%s9 + $0x20] sm:$0xf]
          %v2302 = vld [vmem:[%s9 + $0x24] sm:$0xf]
          %v2303 = vld [vmem:[%s9 + $0x28] sm:$0xf]
          %v2304 = vld [vmem:[%s9 + $0x2c] sm:$0xf]
          %v2305 = vld [vmem:[%s9 + $0x30] sm:$0xf]
          %v2306 = vld [vmem:[%s9 + $0x34] sm:$0xf]
          %v2307 = vld [vmem:[%s9 + $0x38] sm:$0xf]
          %v2308 = vld [vmem:[%s9 + $0x3c] sm:$0xf]
          %v2325 = vunpack.c.l.b16 %v2293
          %v2326 = vunpack.c.l.b16 %v2294
          %v2327 = vunpack.c.l.b16 %v2295
          %v2328 = vunpack.c.l.b16 %v2296
          %v2329 = vunpack.c.l.b16 %v2297
          %v2330 = vunpack.c.l.b16 %v2298
          %v2331 = vunpack.c.l.b16 %v2299
          %v2332 = vunpack.c.l.b16 %v2300
          %v2333 = vunpack.c.l.b16 %v2301
          %v2334 = vunpack.c.l.b16 %v2302
          %v2335 = vunpack.c.l.b16 %v2303
          %v2336 = vunpack.c.l.b16 %v2304
          %v2337 = vunpack.c.l.b16 %v2305
          %v2338 = vunpack.c.l.b16 %v2306
          %v2339 = vunpack.c.l.b16 %v2307
          %v2340 = vunpack.c.l.b16 %v2308
          %v2341 = vpack.c.b16 %v2326, %v2325
          %v2342 = vpack.c.b16 %v2328, %v2327
          %v2343 = vpack.c.b16 %v2330, %v2329
          %v2344 = vpack.c.b16 %v2332, %v2331
          %v2345 = vpack.c.b16 %v2334, %v2333
          %v2346 = vpack.c.b16 %v2336, %v2335
          %v2347 = vpack.c.b16 %v2338, %v2337
          %v2348 = vpack.c.b16 %v2340, %v2339
          %2357 = vmatprep.subr.bf16.mxu0 0
          %2358 = vmatpush1.bf16.msra.mxu0 %v2341
          %2359 = vmatprep.subr.bf16.mxu0 0
          %2360 = vmatpush1.bf16.msra.mxu0 %v2342
          %2361 = vmatprep.subr.bf16.mxu0 0
          %2362 = vmatpush1.bf16.msra.mxu0 %v2343
          %2363 = vmatprep.subr.bf16.mxu0 0
          %2364 = vmatpush1.bf16.msra.mxu0 %v2344
          %2365 = vmatprep.subr.bf16.mxu0 0
          %2366 = vmatpush1.bf16.msra.mxu0 %v2345
          %2367 = vmatprep.subr.bf16.mxu0 0
          %2368 = vmatpush1.bf16.msra.mxu0 %v2346
          %2369 = vmatprep.subr.bf16.mxu0 0
          %2370 = vmatpush1.bf16.msra.mxu0 %v2347
          %2371 = vmatprep.subr.bf16.mxu0 0
          %2372 = vmatpush1.bf16.msra.mxu0 %v2348
          %2373 = vmatprep.subr.bf16.mxu0 0
          %2374 = vmatpush1.bf16.msra.mxu0 0
          %2375 = vmatprep.subr.bf16.mxu0 0
          %2376 = vmatpush1.bf16.msra.mxu0 0
          %2377 = vmatprep.subr.bf16.mxu0 0
          %2378 = vmatpush1.bf16.msra.mxu0 0
          %2379 = vmatprep.subr.bf16.mxu0 0
          %2380 = vmatpush1.bf16.msra.mxu0 0
          %2381 = vmatprep.subr.bf16.mxu0 0
          %2382 = vmatpush1.bf16.msra.mxu0 0
          %2383 = vmatprep.subr.bf16.mxu0 0
          %2384 = vmatpush1.bf16.msra.mxu0 0
          %2385 = vmatprep.subr.bf16.mxu0 0
          %2386 = vmatpush1.bf16.msra.mxu0 0
          %2387 = vmatprep.subr.bf16.mxu0 0
          %2388 = vmatpush1.bf16.msra.mxu0 0
          %2389 = vmatprep.mubr.bf16.mxu0 0
          %2390 = vmatmul.mubr.bf16.gmra.mrb[0].mxu0 %v2289
          %v2391 = vpop.f32.mrb[0].mxu0
          %v2392 = vadd.f32 0.0, %v2391
          %v2393 = vpop.f32.mrb[0].mxu0
          %v2394 = vpop.f32.mrb[0].mxu0
          %v2395 = vadd.f32 0.0, %v2394
          %v2396 = vpop.f32.mrb[0].mxu0
          %2397 = vmatprep.mubr.bf16.mxu0 0
          %2398 = vmatmul.mubr.bf16.gmra.mrb[0].mxu0 %v2290
          %v2399 = vpop.f32.mrb[0].mxu0
          %v2400 = vadd.f32 0.0, %v2399
          %v2401 = vpop.f32.mrb[0].mxu0
          %v2402 = vpop.f32.mrb[0].mxu0
          %v2403 = vadd.f32 0.0, %v2402
          %v2404 = vpop.f32.mrb[0].mxu0
          %2405 = vmatprep.mubr.bf16.mxu0 0
          %2406 = vmatmul.mubr.bf16.gmra.mrb[0].mxu0 %v2291
          %v2407 = vpop.f32.mrb[0].mxu0
          %v2408 = vadd.f32 0.0, %v2407
          %v2409 = vpop.f32.mrb[0].mxu0
          %v2410 = vpop.f32.mrb[0].mxu0
          %v2411 = vadd.f32 0.0, %v2410
          %v2412 = vpop.f32.mrb[0].mxu0
          %2413 = vmatprep.mubr.bf16.mxu0 0
          %2414 = vmatmul.mubr.bf16.gmra.mrb[0].mxu0 %v2292
          %v2415 = vpop.f32.mrb[0].mxu0
          %v2416 = vadd.f32 0.0, %v2415
          %v2417 = vpop.f32.mrb[0].mxu0
          %v2418 = vpop.f32.mrb[0].mxu0
          %v2419 = vadd.f32 0.0, %v2418
          %v2420 = vpop.f32.mrb[0].mxu0
          %2421 = vdwg.mxu0
          %v2422 = vld [vmem:[#allocation4] sm:$0xff]
          %v2423 = vld [vmem:[#allocation4 + $0x8] sm:$0xff]
          %v2424 = vld [vmem:[#allocation4 + $0x10] sm:$0xff]
          %v2425 = vld [vmem:[#allocation4 + $0x18] sm:$0xff]
          %v2426 = vld [vmem:[#allocation4 + $0x20] sm:$0xff]
          %v2427 = vld [vmem:[#allocation4 + $0x28] sm:$0xff]
          %v2428 = vld [vmem:[#allocation4 + $0x30] sm:$0xff]
          %v2429 = vld [vmem:[#allocation4 + $0x38] sm:$0xff]
          %v2430 = vadd.f32 %v2422, %v2392
          %v2431 = vadd.f32 %v2423, %v2395
          %v2432 = vadd.f32 %v2424, %v2400
          %v2433 = vadd.f32 %v2425, %v2403
          %v2434 = vadd.f32 %v2426, %v2408
          %v2435 = vadd.f32 %v2427, %v2411
          %v2436 = vadd.f32 %v2428, %v2416
          %v2437 = vadd.f32 %v2429, %v2419
          %v2438 = vmax.f32 %v2430, 0.0
          %v2439 = vmax.f32 %v2431, 0.0
          %v2440 = vmax.f32 %v2432, 0.0
          %v2441 = vmax.f32 %v2433, 0.0
          %v2442 = vmax.f32 %v2434, 0.0
          %v2443 = vmax.f32 %v2435, 0.0
          %v2444 = vmax.f32 %v2436, 0.0
          %v2445 = vmax.f32 %v2437, 0.0
          %2446 = vst [vmem:[#allocation8] sm:$0xff] %v2438
          %2447 = vst [vmem:[#allocation8 + $0x8] sm:$0xff] %v2439
          %2448 = vst [vmem:[#allocation8 + $0x10] sm:$0xff] %v2440
          %2449 = vst [vmem:[#allocation8 + $0x18] sm:$0xff] %v2441
          %2450 = vst [vmem:[#allocation8 + $0x20] sm:$0xff] %v2442
          %2451 = vst [vmem:[#allocation8 + $0x28] sm:$0xff] %v2443
          %2452 = vst [vmem:[#allocation8 + $0x30] sm:$0xff] %v2444
          %2453 = vst [vmem:[#allocation8 + $0x38] sm:$0xff] %v2445
        $region68: #{scene_construction_forward.1} parent=59 // pred_fallthru
          _
        // Predicated region
        $region69: #{scene_construction_forward.1} parent=59 // pred_check
          %p2454 = pneg %p265
        $region70: #{scene_construction_forward.1} parent=59 // pred_check_branch
          %2456 = sbr.rel (%p2454) target = $region72
        $region71: #{scene_construction_forward.1} parent=59 // pred_region
          %s2458 = ssub.s32 1024, 1024
          %2459 = vsyncadd [#allocation9], %s2458
          %s2460 = sshll.u32 [#allocation8], 4
          %s2461 = int_to_ptr.vmem [resolvable:$true] %s2460
          %2466 = dma.vmem_to_hbm [thread:$0]  %s2461, 1024, %s10, [#allocation9], 128, 128, 8
        $region72: #{scene_construction_forward.1} parent=59 // pred_fallthru
          _
        // Predicated region
        $region73: #{scene_construction_forward.1} parent=59 // pred_check
          %p2467 = pneg %p265
        $region74: #{scene_construction_forward.1} parent=59 // pred_check_branch
          %2469 = sbr.rel (%p2467) target = $region76
        $region75: #{scene_construction_forward.1} parent=59 // pred_region
          %2470 = dma.done [#allocation9], 1024
        $region76: #{scene_construction_forward.1} parent=59 // pred_fallthru
          _
      $region60: #{scene_construction_forward.1} parent=5 // pred_fallthru
        _
      %p2471 = scmp.le.s32.totalorder 2, %s17
      // Predicated region
      $region77: #{scene_construction_forward.1} parent=5 // pred_check
        %p2472 = pneg %p2471
      $region78: #{scene_construction_forward.1} parent=5 // pred_check_branch
        %2474 = sbr.rel (%p2472) target = $region80
      $region79: #{scene_construction_forward.1} parent=5 // pred_region
        %s2475 = ssub.s32 %s17, 2
      $region80: #{scene_construction_forward.1} parent=5 // pred_fallthru
        _
    $region6: #{scene_construction_forward.1} parent=1 // loop_footer
      %s21 = sadd.s32 1, %s17
    $region7: #{scene_construction_forward.1} parent=1 // loop_footer_branch
      %16 = sbr.rel target = $region3
    $region8: #{scene_construction_forward.1} parent=1 // loop_exit
      _
    %2476 = vsyncpa [#allocation9], 1
    %s2477 = scalar_lea.sflag [#allocation9], 1
    %2478 = vsyncpa %s2477, 1

</llo_original>
